<compile_context>
chip_gen: v5e
topology: v5e:2x2
jax: 0.10.0
libtpu: 0.0.40
codegen_flags: <defaults>
</compile_context>

<pallas_src>
import functools
import math

import jax
import jax.numpy as jnp
from jax.experimental import pallas as pl
from jax.experimental.pallas import tpu as pltpu


def _layer_norm(x, gamma, beta, eps=1e-5):
    mu = jnp.mean(x, axis=-1, keepdims=True)
    var = jnp.mean((x - mu) ** 2, axis=-1, keepdims=True)   # biased var (PyTorch LayerNorm)
    return (x - mu) * jax.lax.rsqrt(var + eps) * gamma + beta


def encoder_layer_kernel(x_q_ref, x_kv_ref,
                         wq_ref, bq_ref, wkv_ref, bkv_ref,
                         wo_ref, bo_ref, g1_ref, be1_ref,
                         w1_ref, b1_ref, w2_ref, b2_ref, g2_ref, be2_ref,
                         o_ref, *, n_heads):
    f32, bf16 = jnp.float32, jnp.bfloat16

    x_q = x_q_ref[0]                        # (TQ, D) f32  -- residual path stays f32
    x_kv = x_kv_ref[0]                      # (S,  D) f32

    # weights cast to bf16 once (MXU-native); biases / LN params stay f32
    wq = wq_ref[...].astype(bf16)           # (D, H*dk)
    wkv = wkv_ref[...].astype(bf16)         # (D, 2*H*dk)
    wo = wo_ref[...].astype(bf16)           # (H*dk, D)
    w1 = w1_ref[...].astype(bf16)           # (D, F)
    w2 = w2_ref[...].astype(bf16)           # (F, D)
    bq, bkv = bq_ref[...], bkv_ref[...]
    bo, b1, b2 = bo_ref[...], b1_ref[...], b2_ref[...]
    g1, be1 = g1_ref[...], be1_ref[...]
    g2, be2 = g2_ref[...], be2_ref[...]

    hdk = wq.shape[1]
    dk = hdk // n_heads
    scale = 1.0 / math.sqrt(dk)

    # ---- fused wide projections (one matmul for Q of the tile, one for K&V of all rows) ----
    q_all = (jnp.dot(x_q.astype(bf16), wq, preferred_element_type=f32) + bq) * scale  # (TQ, H*dk)
    kv_all = jnp.dot(x_kv.astype(bf16), wkv, preferred_element_type=f32) + bkv        # (S, 2*H*dk)
    k_all = kv_all[:, :hdk]
    v_all = kv_all[:, hdk:]

    q_all = q_all.astype(bf16)
    kt_all = k_all.T.astype(bf16)            # (H*dk, S): one transpose shared by all heads
    v_all = v_all.astype(bf16)

    # ---- per-head attention (softmax is independent per head) ----
    head_outs = []
    for h in range(n_heads):
        sl = slice(h * dk, (h + 1) * dk)
        s = jnp.dot(q_all[:, sl], kt_all[sl, :], preferred_element_type=f32)   # (TQ, S)
        s = s - jnp.max(s, axis=-1, keepdims=True)
        p = jnp.exp(s)
        p = p * pl.reciprocal(jnp.sum(p, axis=-1, keepdims=True), approx=True)
        head_outs.append(jnp.dot(p.astype(bf16), v_all[:, sl],
                                 preferred_element_type=f32))                  # (TQ, dk)
    concat = jnp.concatenate(head_outs, axis=-1)                               # (TQ, H*dk)
    attn = jnp.dot(concat.astype(bf16), wo, preferred_element_type=f32) + bo   # (TQ, D)

    # ---- ResidualConnection #1: LayerNorm(x + dropout(attn)), dropout == identity ----
    h1 = _layer_norm(x_q + attn, g1, be1)

    # ---- feed-forward ----
    f = jnp.dot(h1.astype(bf16), w1, preferred_element_type=f32) + b1
    f = jnp.maximum(f, 0.0)
    f = jnp.dot(f.astype(bf16), w2, preferred_element_type=f32) + b2

    # ---- ResidualConnection #2 ----
    o_ref[0] = _layer_norm(h1 + f, g2, be2)


def encoder_layer(x, params, *, n_heads, tq=None):
    """x: (B, S, D) float32; params: 14-tuple of packed weights for one encoder layer."""
    B, S, D = x.shape
    if tq is None:
        tq = min(S, 256)
    assert S % tq == 0, "sequence length must be divisible by the Q-tile size"
    n_q = S // tq

    def full_spec(arr):
        nd = arr.ndim
        return pl.BlockSpec(arr.shape, lambda b, qi, _nd=nd: (0,) * _nd)

    in_specs = ([pl.BlockSpec((1, tq, D), lambda b, qi: (b, qi, 0)),   # Q-tile rows
                 pl.BlockSpec((1, S, D), lambda b, qi: (b, 0, 0))]     # full rows for K/V
                + [full_spec(p) for p in params])
    out_spec = pl.BlockSpec((1, tq, D), lambda b, qi: (b, qi, 0))

    return pl.pallas_call(
        functools.partial(encoder_layer_kernel, n_heads=n_heads),
        out_shape=jax.ShapeDtypeStruct((B, S, D), jnp.float32),
        grid=(B, n_q),
        in_specs=in_specs,
        out_specs=out_spec,
        compiler_params=pltpu.CompilerParams(
            dimension_semantics=("parallel", "parallel"),
            vmem_limit_bytes=64 * 1024 * 1024,   # re-derive for real model dims / chip
        ),
    )(x, x, *params)


def init_layer_params(key, dim_m, n_heads, dim_ff):
    dk = dim_m // n_heads
    hdk = n_heads * dk
    ks = jax.random.split(key, 10)
    std = 0.05
    wq = jax.random.normal(ks[0], (dim_m, hdk), jnp.float32) * std
    bq = jax.random.normal(ks[1], (1, hdk), jnp.float32) * std
    wkv = jax.random.normal(ks[2], (dim_m, 2 * hdk), jnp.float32) * std
    bkv = jax.random.normal(ks[3], (1, 2 * hdk), jnp.float32) * std
    wo = jax.random.normal(ks[4], (hdk, dim_m), jnp.float32) * std
    bo = jax.random.normal(ks[5], (1, dim_m), jnp.float32) * std
    g1 = jnp.ones((1, dim_m), jnp.float32)
    be1 = jnp.zeros((1, dim_m), jnp.float32)
    w1 = jax.random.normal(ks[6], (dim_m, dim_ff), jnp.float32) * std
    b1 = jax.random.normal(ks[7], (1, dim_ff), jnp.float32) * std
    w2 = jax.random.normal(ks[8], (dim_ff, dim_m), jnp.float32) * std
    b2 = jax.random.normal(ks[9], (1, dim_m), jnp.float32) * std
    g2 = jnp.ones((1, dim_m), jnp.float32)
    be2 = jnp.zeros((1, dim_m), jnp.float32)
    return (wq, bq, wkv, bkv, wo, bo, g1, be1, w1, b1, w2, b2, g2, be2)


def encoder_module(x, all_params, *, n_heads):
    out = x
    for params in all_params:
        out = encoder_layer(out, params, n_heads=n_heads)
    return out


# ---- pure-JAX f32 reference (mirrors PyTorch semantics) for a correctness check ----
def _ref_layer(x, p, n_heads):
    (wq, bq, wkv, bkv, wo, bo, g1, be1, w1, b1, w2, b2, g2, be2) = p
    hdk = wq.shape[1]
    dk = hdk // n_heads
    q = x @ wq + bq
    kv = x @ wkv + bkv
    k, v = kv[..., :hdk], kv[..., hdk:]
    heads = []
    for h in range(n_heads):
        sl = slice(h * dk, (h + 1) * dk)
        s = jnp.einsum('bsd,btd->bst', q[..., sl], k[..., sl]) / math.sqrt(dk)
        a = jax.nn.softmax(s, axis=-1)
        heads.append(jnp.einsum('bst,btd->bsd', a, v[..., sl]))
    attn = jnp.concatenate(heads, axis=-1) @ wo + bo
    h1 = _layer_norm(x + attn, g1, be1)
    f = jnp.maximum(h1 @ w1 + b1, 0.0) @ w2 + b2
    return _layer_norm(h1 + f, g2, be2)


if __name__ == "__main__":
    # small, lane-aligned config: D, H*dk, dim_ff multiples of 128; S multiple of 8
    B, S = 2, 16
    n_encoders, n_heads = 2, 4
    dim_m, dim_ff = 128, 256

    key = jax.random.PRNGKey(0)
    kx, *kls = jax.random.split(key, 1 + n_encoders)
    x = jax.random.normal(kx, (B, S, dim_m), jnp.float32)
    all_params = [init_layer_params(k, dim_m, n_heads, dim_ff) for k in kls]

    out = encoder_module(x, all_params, n_heads=n_heads)
    out = jax.block_until_ready(out)

    ref = x
    for p in all_params:
        ref = _ref_layer(ref, p, n_heads)

    assert out.shape == (B, S, dim_m)
    # bf16 matmul inputs (f32 accumulation) + approx reciprocal -> loosened tolerance
    assert jnp.allclose(out, ref, atol=3e-2, rtol=3e-2), "mismatch vs reference"
    print("KERNEL_OK")
</pallas_src>

<mosaic_0001>
module attributes {stable_mosaic.version = 11 : i64} {
  func.func @encoder_layer_kernel(%arg0: i32, %arg1: i32, %arg2: memref<1x16x128xf32, #tpu.memory_space<vmem>>, %arg3: memref<1x16x128xf32, #tpu.memory_space<vmem>>, %arg4: memref<128x128xf32, #tpu.memory_space<vmem>>, %arg5: memref<1x128xf32, #tpu.memory_space<vmem>>, %arg6: memref<128x256xf32, #tpu.memory_space<vmem>>, %arg7: memref<1x256xf32, #tpu.memory_space<vmem>>, %arg8: memref<128x128xf32, #tpu.memory_space<vmem>>, %arg9: memref<1x128xf32, #tpu.memory_space<vmem>>, %arg10: memref<1x128xf32, #tpu.memory_space<vmem>>, %arg11: memref<1x128xf32, #tpu.memory_space<vmem>>, %arg12: memref<128x256xf32, #tpu.memory_space<vmem>>, %arg13: memref<1x256xf32, #tpu.memory_space<vmem>>, %arg14: memref<256x128xf32, #tpu.memory_space<vmem>>, %arg15: memref<1x128xf32, #tpu.memory_space<vmem>>, %arg16: memref<1x128xf32, #tpu.memory_space<vmem>>, %arg17: memref<1x128xf32, #tpu.memory_space<vmem>>, %arg18: memref<1x16x128xf32, #tpu.memory_space<vmem>>) attributes {dimension_semantics = [#tpu.dimension_semantics<parallel>, #tpu.dimension_semantics<parallel>], iteration_bounds = array<i64: 2, 1>, scalar_prefetch = 0 : i64, scratch_operands = 0 : i64, tpu.core_type = #tpu.core_type<tc>, window_params = [{transform_indices = @transform_0, window_bounds = array<i64: 1, 16, 128>}, {transform_indices = @transform_1, window_bounds = array<i64: 1, 16, 128>}, {pipeline_mode = #tpu.pipeline_mode<synchronous>, transform_indices = @transform_2, window_bounds = array<i64: 128, 128>}, {pipeline_mode = #tpu.pipeline_mode<synchronous>, transform_indices = @transform_3, window_bounds = array<i64: 1, 128>}, {pipeline_mode = #tpu.pipeline_mode<synchronous>, transform_indices = @transform_4, window_bounds = array<i64: 128, 256>}, {pipeline_mode = #tpu.pipeline_mode<synchronous>, transform_indices = @transform_5, window_bounds = array<i64: 1, 256>}, {pipeline_mode = #tpu.pipeline_mode<synchronous>, transform_indices = @transform_6, window_bounds = array<i64: 128, 128>}, {pipeline_mode = #tpu.pipeline_mode<synchronous>, transform_indices = @transform_7, window_bounds = array<i64: 1, 128>}, {pipeline_mode = #tpu.pipeline_mode<synchronous>, transform_indices = @transform_8, window_bounds = array<i64: 1, 128>}, {pipeline_mode = #tpu.pipeline_mode<synchronous>, transform_indices = @transform_9, window_bounds = array<i64: 1, 128>}, {pipeline_mode = #tpu.pipeline_mode<synchronous>, transform_indices = @transform_10, window_bounds = array<i64: 128, 256>}, {pipeline_mode = #tpu.pipeline_mode<synchronous>, transform_indices = @transform_11, window_bounds = array<i64: 1, 256>}, {pipeline_mode = #tpu.pipeline_mode<synchronous>, transform_indices = @transform_12, window_bounds = array<i64: 256, 128>}, {pipeline_mode = #tpu.pipeline_mode<synchronous>, transform_indices = @transform_13, window_bounds = array<i64: 1, 128>}, {pipeline_mode = #tpu.pipeline_mode<synchronous>, transform_indices = @transform_14, window_bounds = array<i64: 1, 128>}, {pipeline_mode = #tpu.pipeline_mode<synchronous>, transform_indices = @transform_15, window_bounds = array<i64: 1, 128>}, {transform_indices = @transform_16, window_bounds = array<i64: 1, 16, 128>}]} {
    %c0 = arith.constant 0 : index
    %c0_0 = arith.constant 0 : index
    %c0_1 = arith.constant 0 : index
    %0 = vector.load %arg2[%c0, %c0_0, %c0_1] : memref<1x16x128xf32, #tpu.memory_space<vmem>>, vector<1x16x128xf32>
    %1 = vector.shape_cast %0 : vector<1x16x128xf32> to vector<16x128xf32>
    %c0_2 = arith.constant 0 : index
    %c0_3 = arith.constant 0 : index
    %c0_4 = arith.constant 0 : index
    %2 = vector.load %arg3[%c0_2, %c0_3, %c0_4] : memref<1x16x128xf32, #tpu.memory_space<vmem>>, vector<1x16x128xf32>
    %3 = vector.shape_cast %2 : vector<1x16x128xf32> to vector<16x128xf32>
    %c0_5 = arith.constant 0 : index
    %c0_6 = arith.constant 0 : index
    %4 = vector.load %arg4[%c0_5, %c0_6] : memref<128x128xf32, #tpu.memory_space<vmem>>, vector<128x128xf32>
    %5 = arith.truncf %4 : vector<128x128xf32> to vector<128x128xbf16>
    %c0_7 = arith.constant 0 : index
    %c0_8 = arith.constant 0 : index
    %6 = vector.load %arg6[%c0_7, %c0_8] : memref<128x256xf32, #tpu.memory_space<vmem>>, vector<128x256xf32>
    %7 = arith.truncf %6 : vector<128x256xf32> to vector<128x256xbf16>
    %c0_9 = arith.constant 0 : index
    %c0_10 = arith.constant 0 : index
    %8 = vector.load %arg8[%c0_9, %c0_10] : memref<128x128xf32, #tpu.memory_space<vmem>>, vector<128x128xf32>
    %9 = arith.truncf %8 : vector<128x128xf32> to vector<128x128xbf16>
    %c0_11 = arith.constant 0 : index
    %c0_12 = arith.constant 0 : index
    %10 = vector.load %arg12[%c0_11, %c0_12] : memref<128x256xf32, #tpu.memory_space<vmem>>, vector<128x256xf32>
    %11 = arith.truncf %10 : vector<128x256xf32> to vector<128x256xbf16>
    %c0_13 = arith.constant 0 : index
    %c0_14 = arith.constant 0 : index
    %12 = vector.load %arg14[%c0_13, %c0_14] : memref<256x128xf32, #tpu.memory_space<vmem>>, vector<256x128xf32>
    %13 = arith.truncf %12 : vector<256x128xf32> to vector<256x128xbf16>
    %c0_15 = arith.constant 0 : index
    %c0_16 = arith.constant 0 : index
    %14 = vector.load %arg5[%c0_15, %c0_16] : memref<1x128xf32, #tpu.memory_space<vmem>>, vector<1x128xf32>
    %c0_17 = arith.constant 0 : index
    %c0_18 = arith.constant 0 : index
    %15 = vector.load %arg7[%c0_17, %c0_18] : memref<1x256xf32, #tpu.memory_space<vmem>>, vector<1x256xf32>
    %c0_19 = arith.constant 0 : index
    %c0_20 = arith.constant 0 : index
    %16 = vector.load %arg9[%c0_19, %c0_20] : memref<1x128xf32, #tpu.memory_space<vmem>>, vector<1x128xf32>
    %c0_21 = arith.constant 0 : index
    %c0_22 = arith.constant 0 : index
    %17 = vector.load %arg13[%c0_21, %c0_22] : memref<1x256xf32, #tpu.memory_space<vmem>>, vector<1x256xf32>
    %c0_23 = arith.constant 0 : index
    %c0_24 = arith.constant 0 : index
    %18 = vector.load %arg15[%c0_23, %c0_24] : memref<1x128xf32, #tpu.memory_space<vmem>>, vector<1x128xf32>
    %c0_25 = arith.constant 0 : index
    %c0_26 = arith.constant 0 : index
    %19 = vector.load %arg10[%c0_25, %c0_26] : memref<1x128xf32, #tpu.memory_space<vmem>>, vector<1x128xf32>
    %c0_27 = arith.constant 0 : index
    %c0_28 = arith.constant 0 : index
    %20 = vector.load %arg11[%c0_27, %c0_28] : memref<1x128xf32, #tpu.memory_space<vmem>>, vector<1x128xf32>
    %c0_29 = arith.constant 0 : index
    %c0_30 = arith.constant 0 : index
    %21 = vector.load %arg16[%c0_29, %c0_30] : memref<1x128xf32, #tpu.memory_space<vmem>>, vector<1x128xf32>
    %c0_31 = arith.constant 0 : index
    %c0_32 = arith.constant 0 : index
    %22 = vector.load %arg17[%c0_31, %c0_32] : memref<1x128xf32, #tpu.memory_space<vmem>>, vector<1x128xf32>
    %23 = arith.truncf %1 : vector<16x128xf32> to vector<16x128xbf16>
    %cst = arith.constant dense<0.000000e+00> : vector<16x128xf32>
    %24 = tpu.matmul %23, %5, %cst {dimension_numbers = #tpu.dot_dimension_numbers<[1], [0], [0], [1], [0, 0, 1, 1], [], []>} : vector<16x128xbf16>, vector<128x128xbf16>, vector<16x128xf32> -> vector<16x128xf32>
    %25 = vector.broadcast %14 : vector<1x128xf32> to vector<16x128xf32>
    %26 = arith.addf %24, %25 : vector<16x128xf32>
    %cst_33 = arith.constant 0.176776692 : f32
    %27 = vector.broadcast %cst_33 : f32 to vector<16x128xf32>
    %28 = arith.mulf %26, %27 : vector<16x128xf32>
    %29 = arith.truncf %3 : vector<16x128xf32> to vector<16x128xbf16>
    %cst_34 = arith.constant dense<0.000000e+00> : vector<16x256xf32>
    %30 = tpu.matmul %29, %7, %cst_34 {dimension_numbers = #tpu.dot_dimension_numbers<[1], [0], [0], [1], [0, 0, 1, 1], [], []>} : vector<16x128xbf16>, vector<128x256xbf16>, vector<16x256xf32> -> vector<16x256xf32>
    %31 = vector.broadcast %15 : vector<1x256xf32> to vector<16x256xf32>
    %32 = arith.addf %30, %31 : vector<16x256xf32>
    %33 = vector.extract_strided_slice %32 {offsets = [0, 0], sizes = [16, 128], strides = [1, 1]} : vector<16x256xf32> to vector<16x128xf32>
    %34 = vector.extract_strided_slice %32 {offsets = [0, 128], sizes = [16, 128], strides = [1, 1]} : vector<16x256xf32> to vector<16x128xf32>
    %35 = arith.truncf %28 : vector<16x128xf32> to vector<16x128xbf16>
    %36 = tpu.transpose %33, [1, 0] : vector<16x128xf32> -> vector<128x16xf32>
    %37 = arith.truncf %36 : vector<128x16xf32> to vector<128x16xbf16>
    %38 = arith.truncf %34 : vector<16x128xf32> to vector<16x128xbf16>
    %39 = vector.extract_strided_slice %35 {offsets = [0, 0], sizes = [16, 32], strides = [1, 1]} : vector<16x128xbf16> to vector<16x32xbf16>
    %40 = vector.extract_strided_slice %37 {offsets = [0, 0], sizes = [32, 16], strides = [1, 1]} : vector<128x16xbf16> to vector<32x16xbf16>
    %cst_35 = arith.constant dense<0.000000e+00> : vector<16x16xf32>
    %41 = tpu.matmul %39, %40, %cst_35 {dimension_numbers = #tpu.dot_dimension_numbers<[1], [0], [0], [1], [0, 0, 1, 1], [], []>} : vector<16x32xbf16>, vector<32x16xbf16>, vector<16x16xf32> -> vector<16x16xf32>
    %cst_36 = arith.constant dense<0xFF800000> : vector<16xf32>
    %42 = vector.multi_reduction <maximumf>, %41, %cst_36 [1] : vector<16x16xf32> to vector<16xf32>
    %43 = vector.shape_cast %42 : vector<16xf32> to vector<16x1xf32>
    %44 = vector.broadcast %43 : vector<16x1xf32> to vector<16x16xf32>
    %45 = arith.subf %41, %44 : vector<16x16xf32>
    %46 = math.exp %45 : vector<16x16xf32>
    %cst_37 = arith.constant dense<0.000000e+00> : vector<16xf32>
    %47 = vector.multi_reduction <add>, %46, %cst_37 [1] : vector<16x16xf32> to vector<16xf32>
    %48 = vector.shape_cast %47 : vector<16xf32> to vector<16x1xf32>
    %49 = tpu.reciprocal %48 {approx = true} : vector<16x1xf32> -> vector<16x1xf32>
    %50 = vector.broadcast %49 : vector<16x1xf32> to vector<16x16xf32>
    %51 = arith.mulf %46, %50 : vector<16x16xf32>
    %52 = arith.truncf %51 : vector<16x16xf32> to vector<16x16xbf16>
    %53 = vector.extract_strided_slice %38 {offsets = [0, 0], sizes = [16, 32], strides = [1, 1]} : vector<16x128xbf16> to vector<16x32xbf16>
    %cst_38 = arith.constant dense<0.000000e+00> : vector<16x32xf32>
    %54 = tpu.matmul %52, %53, %cst_38 {dimension_numbers = #tpu.dot_dimension_numbers<[1], [0], [0], [1], [0, 0, 1, 1], [], []>} : vector<16x16xbf16>, vector<16x32xbf16>, vector<16x32xf32> -> vector<16x32xf32>
    %55 = vector.extract_strided_slice %35 {offsets = [0, 32], sizes = [16, 32], strides = [1, 1]} : vector<16x128xbf16> to vector<16x32xbf16>
    %56 = vector.extract_strided_slice %37 {offsets = [32, 0], sizes = [32, 16], strides = [1, 1]} : vector<128x16xbf16> to vector<32x16xbf16>
    %cst_39 = arith.constant dense<0.000000e+00> : vector<16x16xf32>
    %57 = tpu.matmul %55, %56, %cst_39 {dimension_numbers = #tpu.dot_dimension_numbers<[1], [0], [0], [1], [0, 0, 1, 1], [], []>} : vector<16x32xbf16>, vector<32x16xbf16>, vector<16x16xf32> -> vector<16x16xf32>
    %cst_40 = arith.constant dense<0xFF800000> : vector<16xf32>
    %58 = vector.multi_reduction <maximumf>, %57, %cst_40 [1] : vector<16x16xf32> to vector<16xf32>
    %59 = vector.shape_cast %58 : vector<16xf32> to vector<16x1xf32>
    %60 = vector.broadcast %59 : vector<16x1xf32> to vector<16x16xf32>
    %61 = arith.subf %57, %60 : vector<16x16xf32>
    %62 = math.exp %61 : vector<16x16xf32>
    %cst_41 = arith.constant dense<0.000000e+00> : vector<16xf32>
    %63 = vector.multi_reduction <add>, %62, %cst_41 [1] : vector<16x16xf32> to vector<16xf32>
    %64 = vector.shape_cast %63 : vector<16xf32> to vector<16x1xf32>
    %65 = tpu.reciprocal %64 {approx = true} : vector<16x1xf32> -> vector<16x1xf32>
    %66 = vector.broadcast %65 : vector<16x1xf32> to vector<16x16xf32>
    %67 = arith.mulf %62, %66 : vector<16x16xf32>
    %68 = arith.truncf %67 : vector<16x16xf32> to vector<16x16xbf16>
    %69 = vector.extract_strided_slice %38 {offsets = [0, 32], sizes = [16, 32], strides = [1, 1]} : vector<16x128xbf16> to vector<16x32xbf16>
    %cst_42 = arith.constant dense<0.000000e+00> : vector<16x32xf32>
    %70 = tpu.matmul %68, %69, %cst_42 {dimension_numbers = #tpu.dot_dimension_numbers<[1], [0], [0], [1], [0, 0, 1, 1], [], []>} : vector<16x16xbf16>, vector<16x32xbf16>, vector<16x32xf32> -> vector<16x32xf32>
    %71 = vector.extract_strided_slice %35 {offsets = [0, 64], sizes = [16, 32], strides = [1, 1]} : vector<16x128xbf16> to vector<16x32xbf16>
    %72 = vector.extract_strided_slice %37 {offsets = [64, 0], sizes = [32, 16], strides = [1, 1]} : vector<128x16xbf16> to vector<32x16xbf16>
    %cst_43 = arith.constant dense<0.000000e+00> : vector<16x16xf32>
    %73 = tpu.matmul %71, %72, %cst_43 {dimension_numbers = #tpu.dot_dimension_numbers<[1], [0], [0], [1], [0, 0, 1, 1], [], []>} : vector<16x32xbf16>, vector<32x16xbf16>, vector<16x16xf32> -> vector<16x16xf32>
    %cst_44 = arith.constant dense<0xFF800000> : vector<16xf32>
    %74 = vector.multi_reduction <maximumf>, %73, %cst_44 [1] : vector<16x16xf32> to vector<16xf32>
    %75 = vector.shape_cast %74 : vector<16xf32> to vector<16x1xf32>
    %76 = vector.broadcast %75 : vector<16x1xf32> to vector<16x16xf32>
    %77 = arith.subf %73, %76 : vector<16x16xf32>
    %78 = math.exp %77 : vector<16x16xf32>
    %cst_45 = arith.constant dense<0.000000e+00> : vector<16xf32>
    %79 = vector.multi_reduction <add>, %78, %cst_45 [1] : vector<16x16xf32> to vector<16xf32>
    %80 = vector.shape_cast %79 : vector<16xf32> to vector<16x1xf32>
    %81 = tpu.reciprocal %80 {approx = true} : vector<16x1xf32> -> vector<16x1xf32>
    %82 = vector.broadcast %81 : vector<16x1xf32> to vector<16x16xf32>
    %83 = arith.mulf %78, %82 : vector<16x16xf32>
    %84 = arith.truncf %83 : vector<16x16xf32> to vector<16x16xbf16>
    %85 = vector.extract_strided_slice %38 {offsets = [0, 64], sizes = [16, 32], strides = [1, 1]} : vector<16x128xbf16> to vector<16x32xbf16>
    %cst_46 = arith.constant dense<0.000000e+00> : vector<16x32xf32>
    %86 = tpu.matmul %84, %85, %cst_46 {dimension_numbers = #tpu.dot_dimension_numbers<[1], [0], [0], [1], [0, 0, 1, 1], [], []>} : vector<16x16xbf16>, vector<16x32xbf16>, vector<16x32xf32> -> vector<16x32xf32>
    %87 = vector.extract_strided_slice %35 {offsets = [0, 96], sizes = [16, 32], strides = [1, 1]} : vector<16x128xbf16> to vector<16x32xbf16>
    %88 = vector.extract_strided_slice %37 {offsets = [96, 0], sizes = [32, 16], strides = [1, 1]} : vector<128x16xbf16> to vector<32x16xbf16>
    %cst_47 = arith.constant dense<0.000000e+00> : vector<16x16xf32>
    %89 = tpu.matmul %87, %88, %cst_47 {dimension_numbers = #tpu.dot_dimension_numbers<[1], [0], [0], [1], [0, 0, 1, 1], [], []>} : vector<16x32xbf16>, vector<32x16xbf16>, vector<16x16xf32> -> vector<16x16xf32>
    %cst_48 = arith.constant dense<0xFF800000> : vector<16xf32>
    %90 = vector.multi_reduction <maximumf>, %89, %cst_48 [1] : vector<16x16xf32> to vector<16xf32>
    %91 = vector.shape_cast %90 : vector<16xf32> to vector<16x1xf32>
    %92 = vector.broadcast %91 : vector<16x1xf32> to vector<16x16xf32>
    %93 = arith.subf %89, %92 : vector<16x16xf32>
    %94 = math.exp %93 : vector<16x16xf32>
    %cst_49 = arith.constant dense<0.000000e+00> : vector<16xf32>
    %95 = vector.multi_reduction <add>, %94, %cst_49 [1] : vector<16x16xf32> to vector<16xf32>
    %96 = vector.shape_cast %95 : vector<16xf32> to vector<16x1xf32>
    %97 = tpu.reciprocal %96 {approx = true} : vector<16x1xf32> -> vector<16x1xf32>
    %98 = vector.broadcast %97 : vector<16x1xf32> to vector<16x16xf32>
    %99 = arith.mulf %94, %98 : vector<16x16xf32>
    %100 = arith.truncf %99 : vector<16x16xf32> to vector<16x16xbf16>
    %101 = vector.extract_strided_slice %38 {offsets = [0, 96], sizes = [16, 32], strides = [1, 1]} : vector<16x128xbf16> to vector<16x32xbf16>
    %cst_50 = arith.constant dense<0.000000e+00> : vector<16x32xf32>
    %102 = tpu.matmul %100, %101, %cst_50 {dimension_numbers = #tpu.dot_dimension_numbers<[1], [0], [0], [1], [0, 0, 1, 1], [], []>} : vector<16x16xbf16>, vector<16x32xbf16>, vector<16x32xf32> -> vector<16x32xf32>
    %103 = tpu.concatenate %54, %70, %86, %102 in 1 : vector<16x32xf32>, vector<16x32xf32>, vector<16x32xf32>, vector<16x32xf32> -> vector<16x128xf32>
    %104 = arith.truncf %103 : vector<16x128xf32> to vector<16x128xbf16>
    %cst_51 = arith.constant dense<0.000000e+00> : vector<16x128xf32>
    %105 = tpu.matmul %104, %9, %cst_51 {dimension_numbers = #tpu.dot_dimension_numbers<[1], [0], [0], [1], [0, 0, 1, 1], [], []>} : vector<16x128xbf16>, vector<128x128xbf16>, vector<16x128xf32> -> vector<16x128xf32>
    %106 = vector.broadcast %16 : vector<1x128xf32> to vector<16x128xf32>
    %107 = arith.addf %105, %106 : vector<16x128xf32>
    %108 = arith.addf %1, %107 : vector<16x128xf32>
    %cst_52 = arith.constant dense<0.000000e+00> : vector<16xf32>
    %109 = vector.multi_reduction <add>, %108, %cst_52 [1] : vector<16x128xf32> to vector<16xf32>
    %110 = vector.shape_cast %109 : vector<16xf32> to vector<16x1xf32>
    %cst_53 = arith.constant 1.280000e+02 : f32
    %111 = vector.broadcast %cst_53 : f32 to vector<16x1xf32>
    %112 = arith.divf %110, %111 : vector<16x1xf32>
    %113 = vector.broadcast %112 : vector<16x1xf32> to vector<16x128xf32>
    %114 = arith.subf %108, %113 : vector<16x128xf32>
    %115 = arith.mulf %114, %114 : vector<16x128xf32>
    %cst_54 = arith.constant dense<0.000000e+00> : vector<16xf32>
    %116 = vector.multi_reduction <add>, %115, %cst_54 [1] : vector<16x128xf32> to vector<16xf32>
    %117 = vector.shape_cast %116 : vector<16xf32> to vector<16x1xf32>
    %cst_55 = arith.constant 1.280000e+02 : f32
    %118 = vector.broadcast %cst_55 : f32 to vector<16x1xf32>
    %119 = arith.divf %117, %118 : vector<16x1xf32>
    %120 = vector.broadcast %112 : vector<16x1xf32> to vector<16x128xf32>
    %121 = arith.subf %108, %120 : vector<16x128xf32>
    %cst_56 = arith.constant 9.99999974E-6 : f32
    %122 = vector.broadcast %cst_56 : f32 to vector<16x1xf32>
    %123 = arith.addf %119, %122 : vector<16x1xf32>
    %124 = math.rsqrt %123 : vector<16x1xf32>
    %125 = vector.broadcast %124 : vector<16x1xf32> to vector<16x128xf32>
    %126 = arith.mulf %121, %125 : vector<16x128xf32>
    %127 = vector.broadcast %19 : vector<1x128xf32> to vector<16x128xf32>
    %128 = arith.mulf %126, %127 : vector<16x128xf32>
    %129 = vector.broadcast %20 : vector<1x128xf32> to vector<16x128xf32>
    %130 = arith.addf %128, %129 : vector<16x128xf32>
    %131 = arith.truncf %130 : vector<16x128xf32> to vector<16x128xbf16>
    %cst_57 = arith.constant dense<0.000000e+00> : vector<16x256xf32>
    %132 = tpu.matmul %131, %11, %cst_57 {dimension_numbers = #tpu.dot_dimension_numbers<[1], [0], [0], [1], [0, 0, 1, 1], [], []>} : vector<16x128xbf16>, vector<128x256xbf16>, vector<16x256xf32> -> vector<16x256xf32>
    %133 = vector.broadcast %17 : vector<1x256xf32> to vector<16x256xf32>
    %134 = arith.addf %132, %133 : vector<16x256xf32>
    %cst_58 = arith.constant 0.000000e+00 : f32
    %135 = vector.broadcast %cst_58 : f32 to vector<16x256xf32>
    %136 = arith.maximumf %134, %135 : vector<16x256xf32>
    %137 = arith.truncf %136 : vector<16x256xf32> to vector<16x256xbf16>
    %cst_59 = arith.constant dense<0.000000e+00> : vector<16x128xf32>
    %138 = tpu.matmul %137, %13, %cst_59 {dimension_numbers = #tpu.dot_dimension_numbers<[1], [0], [0], [1], [0, 0, 1, 1], [], []>} : vector<16x256xbf16>, vector<256x128xbf16>, vector<16x128xf32> -> vector<16x128xf32>
    %139 = vector.broadcast %18 : vector<1x128xf32> to vector<16x128xf32>
    %140 = arith.addf %138, %139 : vector<16x128xf32>
    %141 = arith.addf %130, %140 : vector<16x128xf32>
    %cst_60 = arith.constant dense<0.000000e+00> : vector<16xf32>
    %142 = vector.multi_reduction <add>, %141, %cst_60 [1] : vector<16x128xf32> to vector<16xf32>
    %143 = vector.shape_cast %142 : vector<16xf32> to vector<16x1xf32>
    %cst_61 = arith.constant 1.280000e+02 : f32
    %144 = vector.broadcast %cst_61 : f32 to vector<16x1xf32>
    %145 = arith.divf %143, %144 : vector<16x1xf32>
    %146 = vector.broadcast %145 : vector<16x1xf32> to vector<16x128xf32>
    %147 = arith.subf %141, %146 : vector<16x128xf32>
    %148 = arith.mulf %147, %147 : vector<16x128xf32>
    %cst_62 = arith.constant dense<0.000000e+00> : vector<16xf32>
    %149 = vector.multi_reduction <add>, %148, %cst_62 [1] : vector<16x128xf32> to vector<16xf32>
    %150 = vector.shape_cast %149 : vector<16xf32> to vector<16x1xf32>
    %cst_63 = arith.constant 1.280000e+02 : f32
    %151 = vector.broadcast %cst_63 : f32 to vector<16x1xf32>
    %152 = arith.divf %150, %151 : vector<16x1xf32>
    %153 = vector.broadcast %145 : vector<16x1xf32> to vector<16x128xf32>
    %154 = arith.subf %141, %153 : vector<16x128xf32>
    %cst_64 = arith.constant 9.99999974E-6 : f32
    %155 = vector.broadcast %cst_64 : f32 to vector<16x1xf32>
    %156 = arith.addf %152, %155 : vector<16x1xf32>
    %157 = math.rsqrt %156 : vector<16x1xf32>
    %158 = vector.broadcast %157 : vector<16x1xf32> to vector<16x128xf32>
    %159 = arith.mulf %154, %158 : vector<16x128xf32>
    %160 = vector.broadcast %21 : vector<1x128xf32> to vector<16x128xf32>
    %161 = arith.mulf %159, %160 : vector<16x128xf32>
    %162 = vector.broadcast %22 : vector<1x128xf32> to vector<16x128xf32>
    %163 = arith.addf %161, %162 : vector<16x128xf32>
    %c0_65 = arith.constant 0 : index
    %c0_66 = arith.constant 0 : index
    %c0_67 = arith.constant 0 : index
    %164 = vector.load %arg18[%c0_65, %c0_66, %c0_67] : memref<1x16x128xf32, #tpu.memory_space<vmem>>, vector<1x16x128xf32>
    %165 = vector.shape_cast %164 : vector<1x16x128xf32> to vector<16x128xf32>
    %166 = vector.shape_cast %163 : vector<16x128xf32> to vector<1x16x128xf32>
    tpu.vector_store %arg18[%c0_65, %c0_66, %c0_67], %166 {strides = array<i32>} : memref<1x16x128xf32, #tpu.memory_space<vmem>>, vector<1x16x128xf32>,
    return
  }
  func.func @transform_0(%arg0: i32, %arg1: i32) -> (i32, i32, i32) {
    %c0_i32 = arith.constant 0 : i32
    %c0_i32_0 = arith.constant 0 : i32
    return %arg0, %arg1, %c0_i32 : i32, i32, i32
  }
  func.func @transform_1(%arg0: i32, %arg1: i32) -> (i32, i32, i32) {
    %c0_i32 = arith.constant 0 : i32
    %c0_i32_0 = arith.constant 0 : i32
    %c0_i32_1 = arith.constant 0 : i32
    return %arg0, %c0_i32, %c0_i32_0 : i32, i32, i32
  }
  func.func @transform_2(%arg0: i32, %arg1: i32) -> (i32, i32) {
    %c0_i32 = arith.constant 0 : i32
    %c0_i32_0 = arith.constant 0 : i32
    %c0_i32_1 = arith.constant 0 : i32
    return %c0_i32, %c0_i32_0 : i32, i32
  }
  func.func @transform_3(%arg0: i32, %arg1: i32) -> (i32, i32) {
    %c0_i32 = arith.constant 0 : i32
    %c0_i32_0 = arith.constant 0 : i32
    %c0_i32_1 = arith.constant 0 : i32
    return %c0_i32, %c0_i32_0 : i32, i32
  }
  func.func @transform_4(%arg0: i32, %arg1: i32) -> (i32, i32) {
    %c0_i32 = arith.constant 0 : i32
    %c0_i32_0 = arith.constant 0 : i32
    %c0_i32_1 = arith.constant 0 : i32
    return %c0_i32, %c0_i32_0 : i32, i32
  }
  func.func @transform_5(%arg0: i32, %arg1: i32) -> (i32, i32) {
    %c0_i32 = arith.constant 0 : i32
    %c0_i32_0 = arith.constant 0 : i32
    %c0_i32_1 = arith.constant 0 : i32
    return %c0_i32, %c0_i32_0 : i32, i32
  }
  func.func @transform_6(%arg0: i32, %arg1: i32) -> (i32, i32) {
    %c0_i32 = arith.constant 0 : i32
    %c0_i32_0 = arith.constant 0 : i32
    %c0_i32_1 = arith.constant 0 : i32
    return %c0_i32, %c0_i32_0 : i32, i32
  }
  func.func @transform_7(%arg0: i32, %arg1: i32) -> (i32, i32) {
    %c0_i32 = arith.constant 0 : i32
    %c0_i32_0 = arith.constant 0 : i32
    %c0_i32_1 = arith.constant 0 : i32
    return %c0_i32, %c0_i32_0 : i32, i32
  }
  func.func @transform_8(%arg0: i32, %arg1: i32) -> (i32, i32) {
    %c0_i32 = arith.constant 0 : i32
    %c0_i32_0 = arith.constant 0 : i32
    %c0_i32_1 = arith.constant 0 : i32
    return %c0_i32, %c0_i32_0 : i32, i32
  }
  func.func @transform_9(%arg0: i32, %arg1: i32) -> (i32, i32) {
    %c0_i32 = arith.constant 0 : i32
    %c0_i32_0 = arith.constant 0 : i32
    %c0_i32_1 = arith.constant 0 : i32
    return %c0_i32, %c0_i32_0 : i32, i32
  }
  func.func @transform_10(%arg0: i32, %arg1: i32) -> (i32, i32) {
    %c0_i32 = arith.constant 0 : i32
    %c0_i32_0 = arith.constant 0 : i32
    %c0_i32_1 = arith.constant 0 : i32
    return %c0_i32, %c0_i32_0 : i32, i32
  }
  func.func @transform_11(%arg0: i32, %arg1: i32) -> (i32, i32) {
    %c0_i32 = arith.constant 0 : i32
    %c0_i32_0 = arith.constant 0 : i32
    %c0_i32_1 = arith.constant 0 : i32
    return %c0_i32, %c0_i32_0 : i32, i32
  }
  func.func @transform_12(%arg0: i32, %arg1: i32) -> (i32, i32) {
    %c0_i32 = arith.constant 0 : i32
    %c0_i32_0 = arith.constant 0 : i32
    %c0_i32_1 = arith.constant 0 : i32
    return %c0_i32, %c0_i32_0 : i32, i32
  }
  func.func @transform_13(%arg0: i32, %arg1: i32) -> (i32, i32) {
    %c0_i32 = arith.constant 0 : i32
    %c0_i32_0 = arith.constant 0 : i32
    %c0_i32_1 = arith.constant 0 : i32
    return %c0_i32, %c0_i32_0 : i32, i32
  }
  func.func @transform_14(%arg0: i32, %arg1: i32) -> (i32, i32) {
    %c0_i32 = arith.constant 0 : i32
    %c0_i32_0 = arith.constant 0 : i32
    %c0_i32_1 = arith.constant 0 : i32
    return %c0_i32, %c0_i32_0 : i32, i32
  }
  func.func @transform_15(%arg0: i32, %arg1: i32) -> (i32, i32) {
    %c0_i32 = arith.constant 0 : i32
    %c0_i32_0 = arith.constant 0 : i32
    %c0_i32_1 = arith.constant 0 : i32
    return %c0_i32, %c0_i32_0 : i32, i32
  }
  func.func @transform_16(%arg0: i32, %arg1: i32) -> (i32, i32, i32) {
    %c0_i32 = arith.constant 0 : i32
    %c0_i32_0 = arith.constant 0 : i32
    return %arg0, %arg1, %c0_i32 : i32, i32, i32
  }
}

</mosaic_0001>

<llo_original>
// kernel: tpu_custom_call.1
$region0: #{tpu_custom_call.1}
  #allocation0 [shape = 'u32[]', space=smem, size = 0x4, offset = 0x4, fixed_abs, tag = 'smem constant byte address 0x4 - core index']
  #allocation1 [shape = 'u32[72,128]{1,0:T(1,128)}', space=vmem, size = 0x9000, scoped, tag = 'internal scratch']
  %s0 = inlined_call_operand.hbm [shape: f32[2,16,128], index: 0, kind: input, shape index: {}]
  %s1 = inlined_call_operand.hbm [shape: f32[2,16,128], index: 1, kind: input, shape index: {}]
  %s2 = inlined_call_operand.hbm [shape: f32[128,128], index: 2, kind: input, shape index: {}]
  %s3 = inlined_call_operand.hbm [shape: f32[1,128], index: 3, kind: input, shape index: {}]
  %s4 = inlined_call_operand.hbm [shape: f32[128,256], index: 4, kind: input, shape index: {}]
  %s5 = inlined_call_operand.vmem [shape: f32[1,256], index: 5, kind: input, shape index: {}]
  %s6 = inlined_call_operand.hbm [shape: f32[128,128], index: 6, kind: input, shape index: {}]
  %s7 = inlined_call_operand.vmem [shape: f32[1,128], index: 7, kind: input, shape index: {}]
  %s8 = inlined_call_operand.vmem [shape: f32[1,128], index: 8, kind: input, shape index: {}]
  %s9 = inlined_call_operand.vmem [shape: f32[1,128], index: 9, kind: input, shape index: {}]
  %s10 = inlined_call_operand.hbm [shape: f32[128,256], index: 10, kind: input, shape index: {}]
  %s11 = inlined_call_operand.vmem [shape: f32[1,256], index: 11, kind: input, shape index: {}]
  %s12 = inlined_call_operand.hbm [shape: f32[256,128], index: 12, kind: input, shape index: {}]
  %s13 = inlined_call_operand.vmem [shape: f32[1,128], index: 13, kind: input, shape index: {}]
  %s14 = inlined_call_operand.vmem [shape: f32[1,128], index: 14, kind: input, shape index: {}]
  %s15 = inlined_call_operand.vmem [shape: f32[1,128], index: 15, kind: input, shape index: {}]
  %s16 = inlined_call_operand.hbm [shape: f32[2,16,128], index: 16, kind: output, shape index: {}]
  %s17 = sld [smem:[#allocation0]]
  $region129: #{tpu_custom_call.1} parent=0
    _
  %s19 = ssub.s32 1, %s17
  %s20 = scalar_select 0, %s19, %s17
  $region1: #{tpu_custom_call.1} parent=0
    #allocation2 [shape = 'u8[16384]{0}', space=vmem, size = 0x4000, scoped, tag = 'input window, operand 0']
    #allocation3 [shape = 's32[2]{0}', space=sflag, size = 0x8, scoped, tag = 'scoped memory for tpu_custom_call.1']
    #allocation4 [shape = 's32[2]{0}', space=sflag, size = 0x8, scoped, tag = 'scoped memory for tpu_custom_call.1']
    #allocation5 [shape = 'u8[16384]{0}', space=vmem, size = 0x4000, scoped, tag = 'input window, operand 1']
    #allocation6 [shape = 's32[2]{0}', space=sflag, size = 0x8, scoped, tag = 'scoped memory for tpu_custom_call.1']
    #allocation7 [shape = 'u8[65536]{0}', space=vmem, size = 0x10000, scoped, tag = 'input window, operand 2, single buffered']
    #allocation8 [shape = 'u8[512]{0}', space=vmem, size = 0x400, scoped, tag = 'input window, operand 3, single buffered']
    #allocation9 [shape = 's32[1]{0}', space=sflag, size = 0x4, scoped, tag = 'scoped memory for tpu_custom_call.1']
    #allocation10 [shape = 'u8[131072]{0}', space=vmem, size = 0x20000, scoped, tag = 'input window, operand 4, single buffered']
    #allocation11 [shape = 'u8[65536]{0}', space=vmem, size = 0x10000, scoped, tag = 'input window, operand 6, single buffered']
    #allocation12 [shape = 's32[1]{0}', space=sflag, size = 0x4, scoped, tag = 'scoped memory for tpu_custom_call.1']
    #allocation13 [shape = 'u8[131072]{0}', space=vmem, size = 0x20000, scoped, tag = 'input window, operand 10, single buffered']
    #allocation14 [shape = 'u8[131072]{0}', space=vmem, size = 0x20000, scoped, tag = 'input window, operand 12, single buffered']
    #allocation15 [shape = 's32[1]{0}', space=sflag, size = 0x4, scoped, tag = 'scoped memory for tpu_custom_call.1']
    #allocation16 [shape = 'u8[16384]{0}', space=vmem, size = 0x4000, scoped, tag = 'output window, operand 0']
    %21 = vsyncpa [#allocation3], 0
    %s22 = scalar_lea.sflag [#allocation3], 1
    %23 = vsyncpa %s22, 0
    %24 = vsyncpa [#allocation6], 0
    %s25 = scalar_lea.sflag [#allocation6], 1
    %26 = vsyncpa %s25, 0
    %27 = vsyncpa [#allocation9], 0
    %28 = vsyncpa [#allocation12], 0
    %29 = vsyncpa [#allocation15], 0
    %30 = vsyncpa [#allocation4], 0
    %s31 = scalar_lea.sflag [#allocation4], 1
    %32 = vsyncpa %s31, 0
    loop: start=0, step=1, limit=4
    $region2: #{tpu_custom_call.1} parent=1 // loop_pre_header
      _
    $region3: #{tpu_custom_call.1} parent=1 // loop_header
      %s34 = sphi 0, %s38
      %p35 = scmp.ge.s32.totalorder %s34, 4
      %s41 = sphi 0, %s53
      %s42 = sphi 0, %s49
      %s43 = sphi 0, %s41
      %s44 = sphi 0, %s42
      %s45 = sphi 0, %s43
      %s46 = sphi 0, %s44
      %s58 = sphi 0, %s60
      %s61 = sphi 0, %s58
      %s62 = sphi 0, %s61
      %s78 = sphi 0, %s62
      %s84 = sphi 0, %s86
      %s87 = sphi 0, %s84
      %s88 = sphi 0, %s87
      %s104 = sphi 0, %s88
      %s108 = sphi 0, %s108
      %s110 = sphi 0, %s108
      %s111 = sphi 0, %s110
      %s125 = sphi 0, %s111
      %s129 = sphi 0, %s129
      %s131 = sphi 0, %s129
      %s132 = sphi 0, %s131
      %s146 = sphi 0, %s132
      %s150 = sphi 0, %s150
      %s152 = sphi 0, %s150
      %s153 = sphi 0, %s152
      %s167 = sphi 0, %s153
      %s171 = sphi 0, %s171
      %s173 = sphi 0, %s171
      %s174 = sphi 0, %s173
      %s188 = sphi 0, %s174
      %s192 = sphi 0, %s192
      %s194 = sphi 0, %s192
      %s195 = sphi 0, %s194
      %s209 = sphi 0, %s195
      %s213 = sphi 0, %s213
      %s215 = sphi 0, %s213
      %s216 = sphi 0, %s215
      %s230 = sphi 0, %s216
      %s234 = sphi 0, %s234
      %s236 = sphi 0, %s234
      %s237 = sphi 0, %s236
      %s251 = sphi 0, %s237
      %s255 = sphi 0, %s255
      %s257 = sphi 0, %s255
      %s258 = sphi 0, %s257
      %s272 = sphi 0, %s258
      %s276 = sphi 0, %s276
      %s278 = sphi 0, %s276
      %s279 = sphi 0, %s278
      %s293 = sphi 0, %s279
      %s297 = sphi 0, %s297
      %s299 = sphi 0, %s297
      %s300 = sphi 0, %s299
      %s314 = sphi 0, %s300
      %s318 = sphi 0, %s318
      %s320 = sphi 0, %s318
      %s321 = sphi 0, %s320
      %s335 = sphi 0, %s321
      %s339 = sphi 0, %s339
      %s341 = sphi 0, %s339
      %s342 = sphi 0, %s341
      %s356 = sphi 0, %s342
      %s360 = sphi 0, %s360
      %s362 = sphi 0, %s360
      %s363 = sphi 0, %s362
      %s377 = sphi 0, %s363
      %s381 = sphi 0, %s381
      %s383 = sphi 0, %s381
      %s384 = sphi 0, %s383
      %s398 = sphi 0, %s384
      %s406 = sphi 0, %s408
      %s409 = sphi 0, %s406
      %s410 = sphi 0, %s409
      %s426 = sphi 0, %s410
    $region4: #{tpu_custom_call.1} parent=1 // loop_header_branch
      %37 = sbr.rel (%p35) target = $region8
    $region5: #{tpu_custom_call.1} parent=1 // loop_body
      %s39 = ssub.s32 %s34, 1
      %s40 = ssub.s32 %s34, 2
      %s47 = sadd.s32 1, %s42
      %p48 = scmp.ge.s32.totalorder %s47, 1
      %s49 = scalar_select %p48, 0, %s47
      %s50 = sadd.s32 1, %s41
      %s51 = scalar_select %p48, %s50, %s41
      %p52 = scmp.ge.s32.totalorder %s51, 2
      %s53 = scalar_select %p52, 0, %s51
      %s54 = ssub.s32 %s41, %s53
      %s55 = ssub.s32 %s42, %s49
      %s56 = sor.u32 %s54, %s55
      %p57 = scmp.eq.s32.totalorder %s56, 0
      %s59 = sadd.s32 %s58, 1
      %s60 = scalar_select %p57, %s58, %s59
      %p63 = pneg %p57
      %p64 = scmp.eq.s32.totalorder %s34, 1
      %p65 = por %p63, %p64
      %p66 = scmp.ne.s32.totalorder %s58, %s61
      %p67 = scmp.eq.s32.totalorder %s34, 0
      %p68 = por %p66, %p67
      %p69 = scmp.ne.s32.totalorder %s58, %s61
      %p70 = scmp.eq.s32.totalorder %s39, 1
      %p71 = por %p69, %p70
      %p72 = scmp.ne.s32.totalorder %s61, %s62
      %p73 = scmp.eq.s32.totalorder %s39, 0
      %p74 = por %p72, %p73
      %p75 = scmp.ne.s32.totalorder %s61, %s62
      %p76 = scmp.eq.s32.totalorder %s40, 1
      %p77 = por %p75, %p76
      %p79 = scmp.ne.s32.totalorder %s62, %s78
      %p80 = scmp.eq.s32.totalorder %s40, 0
      %p81 = por %p79, %p80
      %s82 = ssub.s32 %s41, %s53
      %p83 = scmp.eq.s32.totalorder %s82, 0
      %s85 = sadd.s32 %s84, 1
      %s86 = scalar_select %p83, %s84, %s85
      %p89 = pneg %p83
      %p90 = scmp.eq.s32.totalorder %s34, 1
      %p91 = por %p89, %p90
      %p92 = scmp.ne.s32.totalorder %s84, %s87
      %p93 = scmp.eq.s32.totalorder %s34, 0
      %p94 = por %p92, %p93
      %p95 = scmp.ne.s32.totalorder %s84, %s87
      %p96 = scmp.eq.s32.totalorder %s39, 1
      %p97 = por %p95, %p96
      %p98 = scmp.ne.s32.totalorder %s87, %s88
      %p99 = scmp.eq.s32.totalorder %s39, 0
      %p100 = por %p98, %p99
      %p101 = scmp.ne.s32.totalorder %s87, %s88
      %p102 = scmp.eq.s32.totalorder %s40, 1
      %p103 = por %p101, %p102
      %p105 = scmp.ne.s32.totalorder %s88, %s104
      %p106 = scmp.eq.s32.totalorder %s40, 0
      %p107 = por %p105, %p106
      %s109 = sadd.s32 %s108, 1
      %p112 = scmp.eq.s32.totalorder %s34, 1
      %p113 = scmp.ne.s32.totalorder %s108, %s110
      %p114 = scmp.eq.s32.totalorder %s34, 0
      %p115 = por %p113, %p114
      %p116 = scmp.ne.s32.totalorder %s108, %s110
      %p117 = scmp.eq.s32.totalorder %s39, 1
      %p118 = por %p116, %p117
      %p119 = scmp.ne.s32.totalorder %s110, %s111
      %p120 = scmp.eq.s32.totalorder %s39, 0
      %p121 = por %p119, %p120
      %p122 = scmp.ne.s32.totalorder %s110, %s111
      %p123 = scmp.eq.s32.totalorder %s40, 1
      %p124 = por %p122, %p123
      %p126 = scmp.ne.s32.totalorder %s111, %s125
      %p127 = scmp.eq.s32.totalorder %s40, 0
      %p128 = por %p126, %p127
      %s130 = sadd.s32 %s129, 1
      %p133 = scmp.eq.s32.totalorder %s34, 1
      %p134 = scmp.ne.s32.totalorder %s129, %s131
      %p135 = scmp.eq.s32.totalorder %s34, 0
      %p136 = por %p134, %p135
      %p137 = scmp.ne.s32.totalorder %s129, %s131
      %p138 = scmp.eq.s32.totalorder %s39, 1
      %p139 = por %p137, %p138
      %p140 = scmp.ne.s32.totalorder %s131, %s132
      %p141 = scmp.eq.s32.totalorder %s39, 0
      %p142 = por %p140, %p141
      %p143 = scmp.ne.s32.totalorder %s131, %s132
      %p144 = scmp.eq.s32.totalorder %s40, 1
      %p145 = por %p143, %p144
      %p147 = scmp.ne.s32.totalorder %s132, %s146
      %p148 = scmp.eq.s32.totalorder %s40, 0
      %p149 = por %p147, %p148
      %s151 = sadd.s32 %s150, 1
      %p154 = scmp.eq.s32.totalorder %s34, 1
      %p155 = scmp.ne.s32.totalorder %s150, %s152
      %p156 = scmp.eq.s32.totalorder %s34, 0
      %p157 = por %p155, %p156
      %p158 = scmp.ne.s32.totalorder %s150, %s152
      %p159 = scmp.eq.s32.totalorder %s39, 1
      %p160 = por %p158, %p159
      %p161 = scmp.ne.s32.totalorder %s152, %s153
      %p162 = scmp.eq.s32.totalorder %s39, 0
      %p163 = por %p161, %p162
      %p164 = scmp.ne.s32.totalorder %s152, %s153
      %p165 = scmp.eq.s32.totalorder %s40, 1
      %p166 = por %p164, %p165
      %p168 = scmp.ne.s32.totalorder %s153, %s167
      %p169 = scmp.eq.s32.totalorder %s40, 0
      %p170 = por %p168, %p169
      %s172 = sadd.s32 %s171, 1
      %p175 = scmp.eq.s32.totalorder %s34, 1
      %p176 = scmp.ne.s32.totalorder %s171, %s173
      %p177 = scmp.eq.s32.totalorder %s34, 0
      %p178 = por %p176, %p177
      %p179 = scmp.ne.s32.totalorder %s171, %s173
      %p180 = scmp.eq.s32.totalorder %s39, 1
      %p181 = por %p179, %p180
      %p182 = scmp.ne.s32.totalorder %s173, %s174
      %p183 = scmp.eq.s32.totalorder %s39, 0
      %p184 = por %p182, %p183
      %p185 = scmp.ne.s32.totalorder %s173, %s174
      %p186 = scmp.eq.s32.totalorder %s40, 1
      %p187 = por %p185, %p186
      %p189 = scmp.ne.s32.totalorder %s174, %s188
      %p190 = scmp.eq.s32.totalorder %s40, 0
      %p191 = por %p189, %p190
      %s193 = sadd.s32 %s192, 1
      %p196 = scmp.eq.s32.totalorder %s34, 1
      %p197 = scmp.ne.s32.totalorder %s192, %s194
      %p198 = scmp.eq.s32.totalorder %s34, 0
      %p199 = por %p197, %p198
      %p200 = scmp.ne.s32.totalorder %s192, %s194
      %p201 = scmp.eq.s32.totalorder %s39, 1
      %p202 = por %p200, %p201
      %p203 = scmp.ne.s32.totalorder %s194, %s195
      %p204 = scmp.eq.s32.totalorder %s39, 0
      %p205 = por %p203, %p204
      %p206 = scmp.ne.s32.totalorder %s194, %s195
      %p207 = scmp.eq.s32.totalorder %s40, 1
      %p208 = por %p206, %p207
      %p210 = scmp.ne.s32.totalorder %s195, %s209
      %p211 = scmp.eq.s32.totalorder %s40, 0
      %p212 = por %p210, %p211
      %s214 = sadd.s32 %s213, 1
      %p217 = scmp.eq.s32.totalorder %s34, 1
      %p218 = scmp.ne.s32.totalorder %s213, %s215
      %p219 = scmp.eq.s32.totalorder %s34, 0
      %p220 = por %p218, %p219
      %p221 = scmp.ne.s32.totalorder %s213, %s215
      %p222 = scmp.eq.s32.totalorder %s39, 1
      %p223 = por %p221, %p222
      %p224 = scmp.ne.s32.totalorder %s215, %s216
      %p225 = scmp.eq.s32.totalorder %s39, 0
      %p226 = por %p224, %p225
      %p227 = scmp.ne.s32.totalorder %s215, %s216
      %p228 = scmp.eq.s32.totalorder %s40, 1
      %p229 = por %p227, %p228
      %p231 = scmp.ne.s32.totalorder %s216, %s230
      %p232 = scmp.eq.s32.totalorder %s40, 0
      %p233 = por %p231, %p232
      %s235 = sadd.s32 %s234, 1
      %p238 = scmp.eq.s32.totalorder %s34, 1
      %p239 = scmp.ne.s32.totalorder %s234, %s236
      %p240 = scmp.eq.s32.totalorder %s34, 0
      %p241 = por %p239, %p240
      %p242 = scmp.ne.s32.totalorder %s234, %s236
      %p243 = scmp.eq.s32.totalorder %s39, 1
      %p244 = por %p242, %p243
      %p245 = scmp.ne.s32.totalorder %s236, %s237
      %p246 = scmp.eq.s32.totalorder %s39, 0
      %p247 = por %p245, %p246
      %p248 = scmp.ne.s32.totalorder %s236, %s237
      %p249 = scmp.eq.s32.totalorder %s40, 1
      %p250 = por %p248, %p249
      %p252 = scmp.ne.s32.totalorder %s237, %s251
      %p253 = scmp.eq.s32.totalorder %s40, 0
      %p254 = por %p252, %p253
      %s256 = sadd.s32 %s255, 1
      %p259 = scmp.eq.s32.totalorder %s34, 1
      %p260 = scmp.ne.s32.totalorder %s255, %s257
      %p261 = scmp.eq.s32.totalorder %s34, 0
      %p262 = por %p260, %p261
      %p263 = scmp.ne.s32.totalorder %s255, %s257
      %p264 = scmp.eq.s32.totalorder %s39, 1
      %p265 = por %p263, %p264
      %p266 = scmp.ne.s32.totalorder %s257, %s258
      %p267 = scmp.eq.s32.totalorder %s39, 0
      %p268 = por %p266, %p267
      %p269 = scmp.ne.s32.totalorder %s257, %s258
      %p270 = scmp.eq.s32.totalorder %s40, 1
      %p271 = por %p269, %p270
      %p273 = scmp.ne.s32.totalorder %s258, %s272
      %p274 = scmp.eq.s32.totalorder %s40, 0
      %p275 = por %p273, %p274
      %s277 = sadd.s32 %s276, 1
      %p280 = scmp.eq.s32.totalorder %s34, 1
      %p281 = scmp.ne.s32.totalorder %s276, %s278
      %p282 = scmp.eq.s32.totalorder %s34, 0
      %p283 = por %p281, %p282
      %p284 = scmp.ne.s32.totalorder %s276, %s278
      %p285 = scmp.eq.s32.totalorder %s39, 1
      %p286 = por %p284, %p285
      %p287 = scmp.ne.s32.totalorder %s278, %s279
      %p288 = scmp.eq.s32.totalorder %s39, 0
      %p289 = por %p287, %p288
      %p290 = scmp.ne.s32.totalorder %s278, %s279
      %p291 = scmp.eq.s32.totalorder %s40, 1
      %p292 = por %p290, %p291
      %p294 = scmp.ne.s32.totalorder %s279, %s293
      %p295 = scmp.eq.s32.totalorder %s40, 0
      %p296 = por %p294, %p295
      %s298 = sadd.s32 %s297, 1
      %p301 = scmp.eq.s32.totalorder %s34, 1
      %p302 = scmp.ne.s32.totalorder %s297, %s299
      %p303 = scmp.eq.s32.totalorder %s34, 0
      %p304 = por %p302, %p303
      %p305 = scmp.ne.s32.totalorder %s297, %s299
      %p306 = scmp.eq.s32.totalorder %s39, 1
      %p307 = por %p305, %p306
      %p308 = scmp.ne.s32.totalorder %s299, %s300
      %p309 = scmp.eq.s32.totalorder %s39, 0
      %p310 = por %p308, %p309
      %p311 = scmp.ne.s32.totalorder %s299, %s300
      %p312 = scmp.eq.s32.totalorder %s40, 1
      %p313 = por %p311, %p312
      %p315 = scmp.ne.s32.totalorder %s300, %s314
      %p316 = scmp.eq.s32.totalorder %s40, 0
      %p317 = por %p315, %p316
      %s319 = sadd.s32 %s318, 1
      %p322 = scmp.eq.s32.totalorder %s34, 1
      %p323 = scmp.ne.s32.totalorder %s318, %s320
      %p324 = scmp.eq.s32.totalorder %s34, 0
      %p325 = por %p323, %p324
      %p326 = scmp.ne.s32.totalorder %s318, %s320
      %p327 = scmp.eq.s32.totalorder %s39, 1
      %p328 = por %p326, %p327
      %p329 = scmp.ne.s32.totalorder %s320, %s321
      %p330 = scmp.eq.s32.totalorder %s39, 0
      %p331 = por %p329, %p330
      %p332 = scmp.ne.s32.totalorder %s320, %s321
      %p333 = scmp.eq.s32.totalorder %s40, 1
      %p334 = por %p332, %p333
      %p336 = scmp.ne.s32.totalorder %s321, %s335
      %p337 = scmp.eq.s32.totalorder %s40, 0
      %p338 = por %p336, %p337
      %s340 = sadd.s32 %s339, 1
      %p343 = scmp.eq.s32.totalorder %s34, 1
      %p344 = scmp.ne.s32.totalorder %s339, %s341
      %p345 = scmp.eq.s32.totalorder %s34, 0
      %p346 = por %p344, %p345
      %p347 = scmp.ne.s32.totalorder %s339, %s341
      %p348 = scmp.eq.s32.totalorder %s39, 1
      %p349 = por %p347, %p348
      %p350 = scmp.ne.s32.totalorder %s341, %s342
      %p351 = scmp.eq.s32.totalorder %s39, 0
      %p352 = por %p350, %p351
      %p353 = scmp.ne.s32.totalorder %s341, %s342
      %p354 = scmp.eq.s32.totalorder %s40, 1
      %p355 = por %p353, %p354
      %p357 = scmp.ne.s32.totalorder %s342, %s356
      %p358 = scmp.eq.s32.totalorder %s40, 0
      %p359 = por %p357, %p358
      %s361 = sadd.s32 %s360, 1
      %p364 = scmp.eq.s32.totalorder %s34, 1
      %p365 = scmp.ne.s32.totalorder %s360, %s362
      %p366 = scmp.eq.s32.totalorder %s34, 0
      %p367 = por %p365, %p366
      %p368 = scmp.ne.s32.totalorder %s360, %s362
      %p369 = scmp.eq.s32.totalorder %s39, 1
      %p370 = por %p368, %p369
      %p371 = scmp.ne.s32.totalorder %s362, %s363
      %p372 = scmp.eq.s32.totalorder %s39, 0
      %p373 = por %p371, %p372
      %p374 = scmp.ne.s32.totalorder %s362, %s363
      %p375 = scmp.eq.s32.totalorder %s40, 1
      %p376 = por %p374, %p375
      %p378 = scmp.ne.s32.totalorder %s363, %s377
      %p379 = scmp.eq.s32.totalorder %s40, 0
      %p380 = por %p378, %p379
      %s382 = sadd.s32 %s381, 1
      %p385 = scmp.eq.s32.totalorder %s34, 1
      %p386 = scmp.ne.s32.totalorder %s381, %s383
      %p387 = scmp.eq.s32.totalorder %s34, 0
      %p388 = por %p386, %p387
      %p389 = scmp.ne.s32.totalorder %s381, %s383
      %p390 = scmp.eq.s32.totalorder %s39, 1
      %p391 = por %p389, %p390
      %p392 = scmp.ne.s32.totalorder %s383, %s384
      %p393 = scmp.eq.s32.totalorder %s39, 0
      %p394 = por %p392, %p393
      %p395 = scmp.ne.s32.totalorder %s383, %s384
      %p396 = scmp.eq.s32.totalorder %s40, 1
      %p397 = por %p395, %p396
      %p399 = scmp.ne.s32.totalorder %s384, %s398
      %p400 = scmp.eq.s32.totalorder %s40, 0
      %p401 = por %p399, %p400
      %s402 = ssub.s32 %s41, %s53
      %s403 = ssub.s32 %s42, %s49
      %s404 = sor.u32 %s402, %s403
      %p405 = scmp.eq.s32.totalorder %s404, 0
      %s407 = sadd.s32 %s406, 1
      %s408 = scalar_select %p405, %s406, %s407
      %p411 = pneg %p405
      %p412 = scmp.eq.s32.totalorder %s34, 1
      %p413 = por %p411, %p412
      %p414 = scmp.ne.s32.totalorder %s406, %s409
      %p415 = scmp.eq.s32.totalorder %s34, 0
      %p416 = por %p414, %p415
      %p417 = scmp.ne.s32.totalorder %s406, %s409
      %p418 = scmp.eq.s32.totalorder %s39, 1
      %p419 = por %p417, %p418
      %p420 = scmp.ne.s32.totalorder %s409, %s410
      %p421 = scmp.eq.s32.totalorder %s39, 0
      %p422 = por %p420, %p421
      %p423 = scmp.ne.s32.totalorder %s409, %s410
      %p424 = scmp.eq.s32.totalorder %s40, 1
      %p425 = por %p423, %p424
      %p427 = scmp.ne.s32.totalorder %s410, %s426
      %p428 = scmp.eq.s32.totalorder %s40, 0
      %p429 = por %p427, %p428
      %p430 = scmp.le.s32.totalorder 1, %s34
      %p431 = scmp.lt.s32.totalorder %s34, 3
      %p432 = pnand %p430, %p431
      %p433 = pneg %p432
      // Predicated region
      $region9: #{tpu_custom_call.1} parent=5 // pred_check
        _
      $region10: #{tpu_custom_call.1} parent=5 // pred_check_branch
        %435 = sbr.rel (%p432) target = $region12
      $region11: #{tpu_custom_call.1} parent=5 // pred_region
        %s436 = ssub.s32 %s34, 1
        // Predicated region
        $region13: #{tpu_custom_call.1} parent=11 // pred_check
          %p437 = pneg %p121
        $region14: #{tpu_custom_call.1} parent=11 // pred_check_branch
          %439 = sbr.rel (%p437) target = $region16
        $region15: #{tpu_custom_call.1} parent=11 // pred_region
          %441 = vsyncadd [#allocation6], 0
          %s442 = sshll.u32 %s2, 4
          %s443 = int_to_ptr.hbm [resolvable:$true] %s442
          %s444 = sshll.u32 [#allocation7], 4
          %s445 = int_to_ptr.vmem [resolvable:$true] %s444
          %450 = dma.hbm_to_vmem [thread:$0]  %s443, 2048, %s445, [#allocation6], 128, 128, 8
        $region16: #{tpu_custom_call.1} parent=11 // pred_fallthru
          _
        // Predicated region
        $region17: #{tpu_custom_call.1} parent=11 // pred_check
          %p451 = pneg %p142
        $region18: #{tpu_custom_call.1} parent=11 // pred_check_branch
          %453 = sbr.rel (%p451) target = $region20
        $region19: #{tpu_custom_call.1} parent=11 // pred_region
          %455 = vsyncadd [#allocation9], 0
          %s457 = sshll.u32 %s3, 4
          %s458 = int_to_ptr.hbm [resolvable:$true] %s457
          %s459 = sshll.u32 [#allocation8], 4
          %s460 = int_to_ptr.vmem [resolvable:$true] %s459
          %462 = dma.hbm_to_vmem [thread:$0]  %s458, 16, %s460, [#allocation9]
        $region20: #{tpu_custom_call.1} parent=11 // pred_fallthru
          _
        // Predicated region
        $region21: #{tpu_custom_call.1} parent=11 // pred_check
          %p463 = pneg %p163
        $region22: #{tpu_custom_call.1} parent=11 // pred_check_branch
          %465 = sbr.rel (%p463) target = $region24
        $region23: #{tpu_custom_call.1} parent=11 // pred_region
          %467 = vsyncadd [#allocation9], 0
          %s468 = sshll.u32 %s4, 4
          %s469 = int_to_ptr.hbm [resolvable:$true] %s468
          %s470 = sshll.u32 [#allocation10], 4
          %s471 = int_to_ptr.vmem [resolvable:$true] %s470
          %476 = dma.hbm_to_vmem [thread:$0]  %s469, 4096, %s471, [#allocation9], 256, 256, 16
        $region24: #{tpu_custom_call.1} parent=11 // pred_fallthru
          _
        // Predicated region
        $region25: #{tpu_custom_call.1} parent=11 // pred_check
          %p477 = pneg %p184
        $region26: #{tpu_custom_call.1} parent=11 // pred_check_branch
          %479 = sbr.rel (%p477) target = $region28
        $region27: #{tpu_custom_call.1} parent=11 // pred_region
          _
        $region28: #{tpu_custom_call.1} parent=11 // pred_fallthru
          _
        // Predicated region
        $region29: #{tpu_custom_call.1} parent=11 // pred_check
          %p480 = pneg %p205
        $region30: #{tpu_custom_call.1} parent=11 // pred_check_branch
          %482 = sbr.rel (%p480) target = $region32
        $region31: #{tpu_custom_call.1} parent=11 // pred_region
          %484 = vsyncadd [#allocation12], 0
          %s485 = sshll.u32 %s6, 4
          %s486 = int_to_ptr.hbm [resolvable:$true] %s485
          %s487 = sshll.u32 [#allocation11], 4
          %s488 = int_to_ptr.vmem [resolvable:$true] %s487
          %493 = dma.hbm_to_vmem [thread:$0]  %s486, 2048, %s488, [#allocation12], 128, 128, 8
        $region32: #{tpu_custom_call.1} parent=11 // pred_fallthru
          _
        // Predicated region
        $region33: #{tpu_custom_call.1} parent=11 // pred_check
          %p494 = pneg %p226
        $region34: #{tpu_custom_call.1} parent=11 // pred_check_branch
          %496 = sbr.rel (%p494) target = $region36
        $region35: #{tpu_custom_call.1} parent=11 // pred_region
          _
        $region36: #{tpu_custom_call.1} parent=11 // pred_fallthru
          _
        // Predicated region
        $region37: #{tpu_custom_call.1} parent=11 // pred_check
          %p497 = pneg %p247
        $region38: #{tpu_custom_call.1} parent=11 // pred_check_branch
          %499 = sbr.rel (%p497) target = $region40
        $region39: #{tpu_custom_call.1} parent=11 // pred_region
          _
        $region40: #{tpu_custom_call.1} parent=11 // pred_fallthru
          _
        // Predicated region
        $region41: #{tpu_custom_call.1} parent=11 // pred_check
          %p500 = pneg %p268
        $region42: #{tpu_custom_call.1} parent=11 // pred_check_branch
          %502 = sbr.rel (%p500) target = $region44
        $region43: #{tpu_custom_call.1} parent=11 // pred_region
          _
        $region44: #{tpu_custom_call.1} parent=11 // pred_fallthru
          _
        // Predicated region
        $region45: #{tpu_custom_call.1} parent=11 // pred_check
          %p503 = pneg %p289
        $region46: #{tpu_custom_call.1} parent=11 // pred_check_branch
          %505 = sbr.rel (%p503) target = $region48
        $region47: #{tpu_custom_call.1} parent=11 // pred_region
          %507 = vsyncadd [#allocation12], 0
          %s508 = sshll.u32 %s10, 4
          %s509 = int_to_ptr.hbm [resolvable:$true] %s508
          %s510 = sshll.u32 [#allocation13], 4
          %s511 = int_to_ptr.vmem [resolvable:$true] %s510
          %516 = dma.hbm_to_vmem [thread:$0]  %s509, 4096, %s511, [#allocation12], 256, 256, 16
        $region48: #{tpu_custom_call.1} parent=11 // pred_fallthru
          _
        // Predicated region
        $region49: #{tpu_custom_call.1} parent=11 // pred_check
          %p517 = pneg %p310
        $region50: #{tpu_custom_call.1} parent=11 // pred_check_branch
          %519 = sbr.rel (%p517) target = $region52
        $region51: #{tpu_custom_call.1} parent=11 // pred_region
          _
        $region52: #{tpu_custom_call.1} parent=11 // pred_fallthru
          _
        // Predicated region
        $region53: #{tpu_custom_call.1} parent=11 // pred_check
          %p520 = pneg %p331
        $region54: #{tpu_custom_call.1} parent=11 // pred_check_branch
          %522 = sbr.rel (%p520) target = $region56
        $region55: #{tpu_custom_call.1} parent=11 // pred_region
          %524 = vsyncadd [#allocation15], 0
          %s525 = sshll.u32 %s12, 4
          %s526 = int_to_ptr.hbm [resolvable:$true] %s525
          %s527 = sshll.u32 [#allocation14], 4
          %s528 = int_to_ptr.vmem [resolvable:$true] %s527
          %533 = dma.hbm_to_vmem [thread:$0]  %s526, 4096, %s528, [#allocation15], 128, 128, 8
        $region56: #{tpu_custom_call.1} parent=11 // pred_fallthru
          _
        // Predicated region
        $region57: #{tpu_custom_call.1} parent=11 // pred_check
          %p534 = pneg %p352
        $region58: #{tpu_custom_call.1} parent=11 // pred_check_branch
          %536 = sbr.rel (%p534) target = $region60
        $region59: #{tpu_custom_call.1} parent=11 // pred_region
          _
        $region60: #{tpu_custom_call.1} parent=11 // pred_fallthru
          _
        // Predicated region
        $region61: #{tpu_custom_call.1} parent=11 // pred_check
          %p537 = pneg %p373
        $region62: #{tpu_custom_call.1} parent=11 // pred_check_branch
          %539 = sbr.rel (%p537) target = $region64
        $region63: #{tpu_custom_call.1} parent=11 // pred_region
          _
        $region64: #{tpu_custom_call.1} parent=11 // pred_fallthru
          _
        // Predicated region
        $region65: #{tpu_custom_call.1} parent=11 // pred_check
          %p540 = pneg %p394
        $region66: #{tpu_custom_call.1} parent=11 // pred_check_branch
          %542 = sbr.rel (%p540) target = $region68
        $region67: #{tpu_custom_call.1} parent=11 // pred_region
          _
        $region68: #{tpu_custom_call.1} parent=11 // pred_fallthru
          _
      $region12: #{tpu_custom_call.1} parent=5 // pred_fallthru
        _
      %p543 = scmp.lt.s32.totalorder %s34, 2
      // Predicated region
      $region69: #{tpu_custom_call.1} parent=5 // pred_check
        %p544 = pneg %p543
      $region70: #{tpu_custom_call.1} parent=5 // pred_check_branch
        %546 = sbr.rel (%p544) target = $region72
      $region71: #{tpu_custom_call.1} parent=5 // pred_region
        // Predicated region
        $region73: #{tpu_custom_call.1} parent=71 // pred_check
          %p547 = pneg %p68
        $region74: #{tpu_custom_call.1} parent=71 // pred_check_branch
          %549 = sbr.rel (%p547) target = $region76
        $region75: #{tpu_custom_call.1} parent=71 // pred_region
          %s550 = sand.u32 %s58, 1
          %s551 = scalar_lea.sflag [#allocation3], %s550
          %s552 = sand.u32 %s58, 1
          %s553 = smul.addr %s552, 16
          %s554 = scalar_lea.vmem [#allocation2], %s553
          %s555 = smul.u32 2, %s42
          %557 = vsyncadd %s551, 0
          %s558 = smul.addr %s41, 2
          %s559 = sadd.s32 %s555, %s558
          %s560 = smul.addr %s559, 8
          %s561 = scalar_lea.hbm %s0, %s560
          %s562 = sshll.u32 %s561, 4
          %s563 = int_to_ptr.hbm [resolvable:$true] %s562
          %s564 = sshll.u32 %s554, 4
          %s565 = int_to_ptr.vmem [resolvable:$true] %s564
          %570 = dma.hbm_to_vmem [thread:$0]  %s563, 256, %s565, %s551, 128, 128, 8
        $region76: #{tpu_custom_call.1} parent=71 // pred_fallthru
          _
        // Predicated region
        $region77: #{tpu_custom_call.1} parent=71 // pred_check
          %p571 = pneg %p94
        $region78: #{tpu_custom_call.1} parent=71 // pred_check_branch
          %573 = sbr.rel (%p571) target = $region80
        $region79: #{tpu_custom_call.1} parent=71 // pred_region
          %s574 = sand.u32 %s34, 1
          %s575 = scalar_lea.sflag [#allocation6], %s574
          %s576 = sand.u32 %s84, 1
          %s577 = smul.addr %s576, 16
          %s578 = scalar_lea.vmem [#allocation5], %s577
          %580 = vsyncadd %s575, 0
          %s581 = smul.addr %s41, 2
          %s582 = smul.addr %s581, 8
          %s583 = scalar_lea.hbm %s1, %s582
          %s584 = sshll.u32 %s583, 4
          %s585 = int_to_ptr.hbm [resolvable:$true] %s584
          %s586 = sshll.u32 %s578, 4
          %s587 = int_to_ptr.vmem [resolvable:$true] %s586
          %592 = dma.hbm_to_vmem [thread:$0]  %s585, 256, %s587, %s575, 128, 128, 8
        $region80: #{tpu_custom_call.1} parent=71 // pred_fallthru
          _
      $region72: #{tpu_custom_call.1} parent=5 // pred_fallthru
        _
      %p593 = scmp.le.s32.totalorder 1, %s34
      %p594 = scmp.lt.s32.totalorder %s34, 3
      %p595 = pnand %p593, %p594
      %p596 = pneg %p595
      // Predicated region
      $region81: #{tpu_custom_call.1} parent=5 // pred_check
        _
      $region82: #{tpu_custom_call.1} parent=5 // pred_check_branch
        %598 = sbr.rel (%p595) target = $region84
      $region83: #{tpu_custom_call.1} parent=5 // pred_region
        %s599 = ssub.s32 %s34, 1
        %s600 = sand.u32 %s61, 1
        %s601 = scalar_lea.sflag [#allocation3], %s600
        %s602 = sand.u32 %s61, 1
        %s603 = smul.addr %s602, 16
        %s604 = scalar_lea.vmem [#allocation2], %s603
        // Predicated region
        $region85: #{tpu_custom_call.1} parent=83 // pred_check
          %p605 = pneg %p74
        $region86: #{tpu_custom_call.1} parent=83 // pred_check_branch
          %607 = sbr.rel (%p605) target = $region88
        $region87: #{tpu_custom_call.1} parent=83 // pred_region
          %609 = dma.done %s601, 256
        $region88: #{tpu_custom_call.1} parent=83 // pred_fallthru
          _
        %s610 = sand.u32 %s39, 1
        %s611 = scalar_lea.sflag [#allocation6], %s610
        %s612 = sand.u32 %s87, 1
        %s613 = smul.addr %s612, 16
        %s614 = scalar_lea.vmem [#allocation5], %s613
        // Predicated region
        $region89: #{tpu_custom_call.1} parent=83 // pred_check
          %p615 = pneg %p100
        $region90: #{tpu_custom_call.1} parent=83 // pred_check_branch
          %617 = sbr.rel (%p615) target = $region92
        $region91: #{tpu_custom_call.1} parent=83 // pred_region
          %619 = dma.done %s611, 256
        $region92: #{tpu_custom_call.1} parent=83 // pred_fallthru
          _
        // Predicated region
        $region93: #{tpu_custom_call.1} parent=83 // pred_check
          %p620 = pneg %p121
        $region94: #{tpu_custom_call.1} parent=83 // pred_check_branch
          %622 = sbr.rel (%p620) target = $region96
        $region95: #{tpu_custom_call.1} parent=83 // pred_region
          %624 = dma.done [#allocation6], 2048
        $region96: #{tpu_custom_call.1} parent=83 // pred_fallthru
          _
        // Predicated region
        $region97: #{tpu_custom_call.1} parent=83 // pred_check
          %p625 = pneg %p142
        $region98: #{tpu_custom_call.1} parent=83 // pred_check_branch
          %627 = sbr.rel (%p625) target = $region100
        $region99: #{tpu_custom_call.1} parent=83 // pred_region
          %629 = dma.done [#allocation9], 16
        $region100: #{tpu_custom_call.1} parent=83 // pred_fallthru
          _
        // Predicated region
        $region101: #{tpu_custom_call.1} parent=83 // pred_check
          %p630 = pneg %p163
        $region102: #{tpu_custom_call.1} parent=83 // pred_check_branch
          %632 = sbr.rel (%p630) target = $region104
        $region103: #{tpu_custom_call.1} parent=83 // pred_region
          %634 = dma.done [#allocation9], 4096
        $region104: #{tpu_custom_call.1} parent=83 // pred_fallthru
          _
        // Predicated region
        $region105: #{tpu_custom_call.1} parent=83 // pred_check
          %p635 = pneg %p205
        $region106: #{tpu_custom_call.1} parent=83 // pred_check_branch
          %637 = sbr.rel (%p635) target = $region108
        $region107: #{tpu_custom_call.1} parent=83 // pred_region
          %639 = dma.done [#allocation12], 2048
        $region108: #{tpu_custom_call.1} parent=83 // pred_fallthru
          _
        // Predicated region
        $region109: #{tpu_custom_call.1} parent=83 // pred_check
          %p640 = pneg %p289
        $region110: #{tpu_custom_call.1} parent=83 // pred_check_branch
          %642 = sbr.rel (%p640) target = $region112
        $region111: #{tpu_custom_call.1} parent=83 // pred_region
          %644 = dma.done [#allocation12], 4096
        $region112: #{tpu_custom_call.1} parent=83 // pred_fallthru
          _
        // Predicated region
        $region113: #{tpu_custom_call.1} parent=83 // pred_check
          %p645 = pneg %p331
        $region114: #{tpu_custom_call.1} parent=83 // pred_check_branch
          %647 = sbr.rel (%p645) target = $region116
        $region115: #{tpu_custom_call.1} parent=83 // pred_region
          %649 = dma.done [#allocation15], 4096
        $region116: #{tpu_custom_call.1} parent=83 // pred_fallthru
          _
        %s650 = sand.u32 %s61, 1
        %s651 = scalar_lea.sflag [#allocation3], %s650
        %s652 = sand.u32 %s61, 1
        %s653 = smul.addr %s652, 16
        %s654 = scalar_lea.vmem [#allocation2], %s653
        %p655 = pneg %p74
        %p656 = pneg %p71
        %s657 = sand.u32 %s39, 1
        %s658 = scalar_lea.sflag [#allocation6], %s657
        %s659 = sand.u32 %s87, 1
        %s660 = smul.addr %s659, 16
        %s661 = scalar_lea.vmem [#allocation5], %s660
        %p662 = pneg %p100
        %p663 = pneg %p97
        %p664 = pneg %p121
        %p665 = pneg %p118
        %p666 = pneg %p142
        %p667 = pneg %p139
        %p668 = pneg %p163
        %p669 = pneg %p160
        %p670 = pneg %p184
        %p671 = pneg %p181
        %p672 = pneg %p205
        %p673 = pneg %p202
        %p674 = pneg %p226
        %p675 = pneg %p223
        %p676 = pneg %p247
        %p677 = pneg %p244
        %p678 = pneg %p268
        %p679 = pneg %p265
        %p680 = pneg %p289
        %p681 = pneg %p286
        %p682 = pneg %p310
        %p683 = pneg %p307
        %p684 = pneg %p331
        %p685 = pneg %p328
        %p686 = pneg %p352
        %p687 = pneg %p349
        %p688 = pneg %p373
        %p689 = pneg %p370
        %p690 = pneg %p394
        %p691 = pneg %p391
        %p692 = pneg %p422
        %p693 = pneg %p419
        %s694 = sand.u32 %s409, 1
        %s695 = scalar_lea.sflag [#allocation4], %s694
        %s696 = sand.u32 %s409, 1
        %s697 = smul.addr %s696, 16
        %s698 = scalar_lea.vmem [#allocation16], %s697
        %s699 = smul.u32 2, %s44
        %s700 = smul.u32 2, %s44
        %v702 = vld [vmem:[%s604] sm:$0xff]
        %v703 = vld [vmem:[%s604 + $0x8] sm:$0xff]
        %v704 = vld [vmem:[%s614] sm:$0xff]
        %v705 = vld [vmem:[%s614 + $0x8] sm:$0xff]
        %v706 = vld [vmem:[#allocation7] sm:$0xff]
        %v707 = vld [vmem:[#allocation7 + $0x8] sm:$0xff]
        %v708 = vld [vmem:[#allocation7 + $0x10] sm:$0xff]
        %v709 = vld [vmem:[#allocation7 + $0x18] sm:$0xff]
        %v710 = vld [vmem:[#allocation7 + $0x20] sm:$0xff]
        %v711 = vld [vmem:[#allocation7 + $0x28] sm:$0xff]
        %v712 = vld [vmem:[#allocation7 + $0x30] sm:$0xff]
        %v713 = vld [vmem:[#allocation7 + $0x38] sm:$0xff]
        %v714 = vld [vmem:[#allocation7 + $0x40] sm:$0xff]
        %v715 = vld [vmem:[#allocation7 + $0x48] sm:$0xff]
        %v716 = vld [vmem:[#allocation7 + $0x50] sm:$0xff]
        %v717 = vld [vmem:[#allocation7 + $0x58] sm:$0xff]
        %v718 = vld [vmem:[#allocation7 + $0x60] sm:$0xff]
        %v719 = vld [vmem:[#allocation7 + $0x68] sm:$0xff]
        %v720 = vld [vmem:[#allocation7 + $0x70] sm:$0xff]
        %v721 = vld [vmem:[#allocation7 + $0x78] sm:$0xff]
        %v722 = vpack.c.bf16 %v707, %v706
        %v723 = vpack.c.bf16 %v709, %v708
        %v724 = vpack.c.bf16 %v711, %v710
        %v725 = vpack.c.bf16 %v713, %v712
        %v726 = vpack.c.bf16 %v715, %v714
        %v727 = vpack.c.bf16 %v717, %v716
        %v728 = vpack.c.bf16 %v719, %v718
        %v729 = vpack.c.bf16 %v721, %v720
        %v730 = vld [vmem:[#allocation10] sm:$0xff]
        %v731 = vld [vmem:[#allocation10 + $0x8] sm:$0xff]
        %v732 = vld [vmem:[#allocation10 + $0x10] sm:$0xff]
        %v733 = vld [vmem:[#allocation10 + $0x18] sm:$0xff]
        %v734 = vld [vmem:[#allocation10 + $0x20] sm:$0xff]
        %v735 = vld [vmem:[#allocation10 + $0x28] sm:$0xff]
        %v736 = vld [vmem:[#allocation10 + $0x30] sm:$0xff]
        %v737 = vld [vmem:[#allocation10 + $0x38] sm:$0xff]
        %v738 = vld [vmem:[#allocation10 + $0x40] sm:$0xff]
        %v739 = vld [vmem:[#allocation10 + $0x48] sm:$0xff]
        %v740 = vld [vmem:[#allocation10 + $0x50] sm:$0xff]
        %v741 = vld [vmem:[#allocation10 + $0x58] sm:$0xff]
        %v742 = vld [vmem:[#allocation10 + $0x60] sm:$0xff]
        %v743 = vld [vmem:[#allocation10 + $0x68] sm:$0xff]
        %v744 = vld [vmem:[#allocation10 + $0x70] sm:$0xff]
        %v745 = vld [vmem:[#allocation10 + $0x78] sm:$0xff]
        %v746 = vld [vmem:[#allocation10 + $0x80] sm:$0xff]
        %v747 = vld [vmem:[#allocation10 + $0x88] sm:$0xff]
        %v748 = vld [vmem:[#allocation10 + $0x90] sm:$0xff]
        %v749 = vld [vmem:[#allocation10 + $0x98] sm:$0xff]
        %v750 = vld [vmem:[#allocation10 + $0xa0] sm:$0xff]
        %v751 = vld [vmem:[#allocation10 + $0xa8] sm:$0xff]
        %v752 = vld [vmem:[#allocation10 + $0xb0] sm:$0xff]
        %v753 = vld [vmem:[#allocation10 + $0xb8] sm:$0xff]
        %v754 = vld [vmem:[#allocation10 + $0xc0] sm:$0xff]
        %v755 = vld [vmem:[#allocation10 + $0xc8] sm:$0xff]
        %v756 = vld [vmem:[#allocation10 + $0xd0] sm:$0xff]
        %v757 = vld [vmem:[#allocation10 + $0xd8] sm:$0xff]
        %v758 = vld [vmem:[#allocation10 + $0xe0] sm:$0xff]
        %v759 = vld [vmem:[#allocation10 + $0xe8] sm:$0xff]
        %v760 = vld [vmem:[#allocation10 + $0xf0] sm:$0xff]
        %v761 = vld [vmem:[#allocation10 + $0xf8] sm:$0xff]
        %v762 = vpack.c.bf16 %v732, %v730
        %v763 = vpack.c.bf16 %v733, %v731
        %v764 = vpack.c.bf16 %v736, %v734
        %v765 = vpack.c.bf16 %v737, %v735
        %v766 = vpack.c.bf16 %v740, %v738
        %v767 = vpack.c.bf16 %v741, %v739
        %v768 = vpack.c.bf16 %v744, %v742
        %v769 = vpack.c.bf16 %v745, %v743
        %v770 = vpack.c.bf16 %v748, %v746
        %v771 = vpack.c.bf16 %v749, %v747
        %v772 = vpack.c.bf16 %v752, %v750
        %v773 = vpack.c.bf16 %v753, %v751
        %v774 = vpack.c.bf16 %v756, %v754
        %v775 = vpack.c.bf16 %v757, %v755
        %v776 = vpack.c.bf16 %v760, %v758
        %v777 = vpack.c.bf16 %v761, %v759
        %v778 = vld [vmem:[#allocation11] sm:$0xff]
        %v779 = vld [vmem:[#allocation11 + $0x8] sm:$0xff]
        %v780 = vld [vmem:[#allocation11 + $0x10] sm:$0xff]
        %v781 = vld [vmem:[#allocation11 + $0x18] sm:$0xff]
        %v782 = vld [vmem:[#allocation11 + $0x20] sm:$0xff]
        %v783 = vld [vmem:[#allocation11 + $0x28] sm:$0xff]
        %v784 = vld [vmem:[#allocation11 + $0x30] sm:$0xff]
        %v785 = vld [vmem:[#allocation11 + $0x38] sm:$0xff]
        %v786 = vld [vmem:[#allocation11 + $0x40] sm:$0xff]
        %v787 = vld [vmem:[#allocation11 + $0x48] sm:$0xff]
        %v788 = vld [vmem:[#allocation11 + $0x50] sm:$0xff]
        %v789 = vld [vmem:[#allocation11 + $0x58] sm:$0xff]
        %v790 = vld [vmem:[#allocation11 + $0x60] sm:$0xff]
        %v791 = vld [vmem:[#allocation11 + $0x68] sm:$0xff]
        %v792 = vld [vmem:[#allocation11 + $0x70] sm:$0xff]
        %v793 = vld [vmem:[#allocation11 + $0x78] sm:$0xff]
        %v794 = vpack.c.bf16 %v779, %v778
        %v795 = vpack.c.bf16 %v781, %v780
        %v796 = vpack.c.bf16 %v783, %v782
        %v797 = vpack.c.bf16 %v785, %v784
        %v798 = vpack.c.bf16 %v787, %v786
        %v799 = vpack.c.bf16 %v789, %v788
        %v800 = vpack.c.bf16 %v791, %v790
        %v801 = vpack.c.bf16 %v793, %v792
        %v802 = vld [vmem:[#allocation13] sm:$0xff]
        %v803 = vld [vmem:[#allocation13 + $0x8] sm:$0xff]
        %v804 = vld [vmem:[#allocation13 + $0x10] sm:$0xff]
        %v805 = vld [vmem:[#allocation13 + $0x18] sm:$0xff]
        %v806 = vld [vmem:[#allocation13 + $0x20] sm:$0xff]
        %v807 = vld [vmem:[#allocation13 + $0x28] sm:$0xff]
        %v808 = vld [vmem:[#allocation13 + $0x30] sm:$0xff]
        %v809 = vld [vmem:[#allocation13 + $0x38] sm:$0xff]
        %v810 = vld [vmem:[#allocation13 + $0x40] sm:$0xff]
        %v811 = vld [vmem:[#allocation13 + $0x48] sm:$0xff]
        %v812 = vld [vmem:[#allocation13 + $0x50] sm:$0xff]
        %v813 = vld [vmem:[#allocation13 + $0x58] sm:$0xff]
        %v814 = vld [vmem:[#allocation13 + $0x60] sm:$0xff]
        %v815 = vld [vmem:[#allocation13 + $0x68] sm:$0xff]
        %v816 = vld [vmem:[#allocation13 + $0x70] sm:$0xff]
        %v817 = vld [vmem:[#allocation13 + $0x78] sm:$0xff]
        %v818 = vld [vmem:[#allocation13 + $0x80] sm:$0xff]
        %v819 = vld [vmem:[#allocation13 + $0x88] sm:$0xff]
        %v820 = vld [vmem:[#allocation13 + $0x90] sm:$0xff]
        %v821 = vld [vmem:[#allocation13 + $0x98] sm:$0xff]
        %v822 = vld [vmem:[#allocation13 + $0xa0] sm:$0xff]
        %v823 = vld [vmem:[#allocation13 + $0xa8] sm:$0xff]
        %v824 = vld [vmem:[#allocation13 + $0xb0] sm:$0xff]
        %v825 = vld [vmem:[#allocation13 + $0xb8] sm:$0xff]
        %v826 = vld [vmem:[#allocation13 + $0xc0] sm:$0xff]
        %v827 = vld [vmem:[#allocation13 + $0xc8] sm:$0xff]
        %v828 = vld [vmem:[#allocation13 + $0xd0] sm:$0xff]
        %v829 = vld [vmem:[#allocation13 + $0xd8] sm:$0xff]
        %v830 = vld [vmem:[#allocation13 + $0xe0] sm:$0xff]
        %v831 = vld [vmem:[#allocation13 + $0xe8] sm:$0xff]
        %v832 = vld [vmem:[#allocation13 + $0xf0] sm:$0xff]
        %v833 = vld [vmem:[#allocation13 + $0xf8] sm:$0xff]
        %v834 = vpack.c.bf16 %v804, %v802
        %v835 = vpack.c.bf16 %v805, %v803
        %v836 = vpack.c.bf16 %v808, %v806
        %v837 = vpack.c.bf16 %v809, %v807
        %v838 = vpack.c.bf16 %v812, %v810
        %v839 = vpack.c.bf16 %v813, %v811
        %v840 = vpack.c.bf16 %v816, %v814
        %v841 = vpack.c.bf16 %v817, %v815
        %v842 = vpack.c.bf16 %v820, %v818
        %v843 = vpack.c.bf16 %v821, %v819
        %v844 = vpack.c.bf16 %v824, %v822
        %v845 = vpack.c.bf16 %v825, %v823
        %v846 = vpack.c.bf16 %v828, %v826
        %v847 = vpack.c.bf16 %v829, %v827
        %v848 = vpack.c.bf16 %v832, %v830
        %v849 = vpack.c.bf16 %v833, %v831
        %v850 = vld [vmem:[#allocation14] sm:$0xff]
        %v851 = vld [vmem:[#allocation14 + $0x8] sm:$0xff]
        %v852 = vld [vmem:[#allocation14 + $0x10] sm:$0xff]
        %v853 = vld [vmem:[#allocation14 + $0x18] sm:$0xff]
        %v854 = vld [vmem:[#allocation14 + $0x20] sm:$0xff]
        %v855 = vld [vmem:[#allocation14 + $0x28] sm:$0xff]
        %v856 = vld [vmem:[#allocation14 + $0x30] sm:$0xff]
        %v857 = vld [vmem:[#allocation14 + $0x38] sm:$0xff]
        %v858 = vld [vmem:[#allocation14 + $0x40] sm:$0xff]
        %v859 = vld [vmem:[#allocation14 + $0x48] sm:$0xff]
        %v860 = vld [vmem:[#allocation14 + $0x50] sm:$0xff]
        %v861 = vld [vmem:[#allocation14 + $0x58] sm:$0xff]
        %v862 = vld [vmem:[#allocation14 + $0x60] sm:$0xff]
        %v863 = vld [vmem:[#allocation14 + $0x68] sm:$0xff]
        %v864 = vld [vmem:[#allocation14 + $0x70] sm:$0xff]
        %v865 = vld [vmem:[#allocation14 + $0x78] sm:$0xff]
        %v866 = vld [vmem:[#allocation14 + $0x80] sm:$0xff]
        %v867 = vld [vmem:[#allocation14 + $0x88] sm:$0xff]
        %v868 = vld [vmem:[#allocation14 + $0x90] sm:$0xff]
        %v869 = vld [vmem:[#allocation14 + $0x98] sm:$0xff]
        %v870 = vld [vmem:[#allocation14 + $0xa0] sm:$0xff]
        %v871 = vld [vmem:[#allocation14 + $0xa8] sm:$0xff]
        %v872 = vld [vmem:[#allocation14 + $0xb0] sm:$0xff]
        %v873 = vld [vmem:[#allocation14 + $0xb8] sm:$0xff]
        %v874 = vld [vmem:[#allocation14 + $0xc0] sm:$0xff]
        %v875 = vld [vmem:[#allocation14 + $0xc8] sm:$0xff]
        %v876 = vld [vmem:[#allocation14 + $0xd0] sm:$0xff]
        %v877 = vld [vmem:[#allocation14 + $0xd8] sm:$0xff]
        %v878 = vld [vmem:[#allocation14 + $0xe0] sm:$0xff]
        %v879 = vld [vmem:[#allocation14 + $0xe8] sm:$0xff]
        %v880 = vld [vmem:[#allocation14 + $0xf0] sm:$0xff]
        %v881 = vld [vmem:[#allocation14 + $0xf8] sm:$0xff]
        %v882 = vpack.c.bf16 %v851, %v850
        %v883 = vpack.c.bf16 %v853, %v852
        %v884 = vpack.c.bf16 %v855, %v854
        %v885 = vpack.c.bf16 %v857, %v856
        %v886 = vpack.c.bf16 %v859, %v858
        %v887 = vpack.c.bf16 %v861, %v860
        %v888 = vpack.c.bf16 %v863, %v862
        %v889 = vpack.c.bf16 %v865, %v864
        %v890 = vpack.c.bf16 %v867, %v866
        %v891 = vpack.c.bf16 %v869, %v868
        %v892 = vpack.c.bf16 %v871, %v870
        %v893 = vpack.c.bf16 %v873, %v872
        %v894 = vpack.c.bf16 %v875, %v874
        %v895 = vpack.c.bf16 %v877, %v876
        %v896 = vpack.c.bf16 %v879, %v878
        %v897 = vpack.c.bf16 %v881, %v880
        %v898 = vld [vmem:[#allocation8] sm:$0x1]
        %v899 = vld [vmem:[%s5] sm:$0x3]
        %v900 = vld [vmem:[%s7] sm:$0x1]
        %v901 = vld [vmem:[%s11] sm:$0x3]
        %v902 = vld [vmem:[%s13] sm:$0x1]
        %v903 = vld [vmem:[%s8] sm:$0x1]
        %v904 = vld [vmem:[%s9] sm:$0x1]
        %v905 = vld [vmem:[%s14] sm:$0x1]
        %v906 = vld [vmem:[%s15] sm:$0x1]
        %v907 = vpack.c.bf16 %v703, %v702
        %v909 = vperm.slane %v898, 0
        %911 = vmatpush.bf16.msra.mxu0 %v729
        %912 = vmatpush.bf16.msra.mxu0 %v728
        %913 = vmatpush.bf16.msra.mxu0 %v727
        %914 = vmatpush.bf16.msra.mxu0 %v726
        %915 = vmatpush.bf16.msra.mxu0 %v725
        %916 = vmatpush.bf16.msra.mxu0 %v724
        %917 = vmatpush.bf16.msra.mxu0 %v723
        %918 = vmatpush.bf16.msra.mxu0 %v722
        %919 = vmatmul.bf16.gmra.mxu0 %v907
        %v920 = vpop.f32.mrf.mxu0
        %v921 = vadd.f32 %v909, %v920
        %v922 = vpop.f32.mrf.mxu0
        %v923 = vadd.f32 %v909, %v922
        %924 = vdwg.mxu0
        %v925 = vmul.f32 %v921, 0.17677669
        %v926 = vmul.f32 %v923, 0.17677669
        %v927 = vpack.c.bf16 %v705, %v704
        %v929 = vperm.slane %v899, 0
        %v930 = vperm.slane %v899, 1
        %933 = vmatpush.bf16.msra.mxu0 %v776
        %934 = vmatpush.bf16.msra.mxu0 %v774
        %935 = vmatpush.bf16.msra.mxu0 %v772
        %936 = vmatpush.bf16.msra.mxu0 %v770
        %937 = vmatpush.bf16.msra.mxu0 %v768
        %938 = vmatpush.bf16.msra.mxu0 %v766
        %939 = vmatpush.bf16.msra.mxu0 %v764
        %940 = vmatpush.bf16.msra.mxu0 %v762
        %941 = vmatmul.bf16.gmra.mxu0 %v927
        %v942 = vpop.f32.mrf.mxu0
        %v943 = vadd.f32 %v929, %v942
        %v944 = vpop.f32.mrf.mxu0
        %v945 = vadd.f32 %v929, %v944
        %946 = vdwg.mxu0
        %947 = vmatpush.bf16.msra.mxu0 %v777
        %948 = vmatpush.bf16.msra.mxu0 %v775
        %949 = vmatpush.bf16.msra.mxu0 %v773
        %950 = vmatpush.bf16.msra.mxu0 %v771
        %951 = vmatpush.bf16.msra.mxu0 %v769
        %952 = vmatpush.bf16.msra.mxu0 %v767
        %953 = vmatpush.bf16.msra.mxu0 %v765
        %954 = vmatpush.bf16.msra.mxu0 %v763
        %955 = vmatmul.bf16.gmra.mxu0 %v927
        %v956 = vpop.f32.mrf.mxu0
        %v957 = vadd.f32 %v930, %v956
        %v958 = vpop.f32.mrf.mxu0
        %v959 = vadd.f32 %v930, %v958
        %960 = vdwg.mxu0
        %v961 = vpack.c.bf16 %v925, %v925
        %v962 = vpack.c.bf16 %v926, %v926
        %963 = vxpose.xlu0.b32.start [1/16] %v943, 128
        %964 = vxpose.xlu0.b32.cont [2/16] %v945, 128
        %965 = vxpose.xlu0.b32.cont [3/16] 0.0, 128
        %966 = vxpose.xlu0.b32.cont [4/16] 0.0, 128
        %967 = vxpose.xlu0.b32.cont [5/16] 0.0, 128
        %968 = vxpose.xlu0.b32.cont [6/16] 0.0, 128
        %969 = vxpose.xlu0.b32.cont [7/16] 0.0, 128
        %970 = vxpose.xlu0.b32.cont [8/16] 0.0, 128
        %971 = vxpose.xlu0.b32.cont [9/16] 0.0, 128
        %972 = vxpose.xlu0.b32.cont [10/16] 0.0, 128
        %973 = vxpose.xlu0.b32.cont [11/16] 0.0, 128
        %974 = vxpose.xlu0.b32.cont [12/16] 0.0, 128
        %975 = vxpose.xlu0.b32.cont [13/16] 0.0, 128
        %976 = vxpose.xlu0.b32.cont [14/16] 0.0, 128
        %977 = vxpose.xlu0.b32.cont [15/16] 0.0, 128
        %978 = vxpose.xlu0.b32.end [16/16] 0.0, 128
        %v979 = vpop.trf.xlu0
        %v980 = vpop.trf.xlu0
        %v981 = vpop.trf.xlu0
        %v982 = vpop.trf.xlu0
        %v983 = vpop.trf.xlu0
        %v984 = vpop.trf.xlu0
        %v985 = vpop.trf.xlu0
        %v986 = vpop.trf.xlu0
        %v987 = vpop.trf.xlu0
        %v988 = vpop.trf.xlu0
        %v989 = vpop.trf.xlu0
        %v990 = vpop.trf.xlu0
        %v991 = vpop.trf.xlu0
        %v992 = vpop.trf.xlu0
        %v993 = vpop.trf.xlu0
        %v994 = vpop.trf.xlu0
        %v995 = vpack.c.bf16 %v979, %v979
        %v996 = vpack.c.bf16 %v980, %v980
        %v997 = vpack.c.bf16 %v981, %v981
        %v998 = vpack.c.bf16 %v982, %v982
        %v999 = vpack.c.bf16 %v983, %v983
        %v1000 = vpack.c.bf16 %v984, %v984
        %v1001 = vpack.c.bf16 %v985, %v985
        %v1002 = vpack.c.bf16 %v986, %v986
        %v1003 = vpack.c.bf16 %v987, %v987
        %v1004 = vpack.c.bf16 %v988, %v988
        %v1005 = vpack.c.bf16 %v989, %v989
        %v1006 = vpack.c.bf16 %v990, %v990
        %v1007 = vpack.c.bf16 %v991, %v991
        %v1008 = vpack.c.bf16 %v992, %v992
        %v1009 = vpack.c.bf16 %v993, %v993
        %v1010 = vpack.c.bf16 %v994, %v994
        %v1011 = vpack.c.bf16 %v957, %v957
        %v1012 = vpack.c.bf16 %v959, %v959
        %v1015 = vunpack.c.l.b16 %v961
        %v1016 = vunpack.c.l.b16 %v962
        %v1017 = vpack.c.b16 %v1016, %v1015
        %v1022 = vunpack.c.l.b16 %v995
        %v1023 = vunpack.c.l.b16 %v996
        %v1024 = vunpack.c.l.b16 %v997
        %v1025 = vunpack.c.l.b16 %v998
        %v1026 = vpack.c.b16 %v1023, %v1022
        %v1027 = vpack.c.b16 %v1025, %v1024
        %vm1030 = vcmask 261120
        %v1032 = vsel %vm1030, %v1017, 0
        %1034 = vmatpush.bf16.msra.mxu0 0
        %1035 = vmatpush.bf16.msra.mxu0 0
        %1036 = vmatpush.bf16.msra.mxu0 0
        %1037 = vmatpush.bf16.msra.mxu0 0
        %1038 = vmatpush.bf16.msra.mxu0 0
        %1039 = vmatpush.bf16.msra.mxu0 0
        %1040 = vmatpush.bf16.msra.mxu0 %v1027
        %1041 = vmatpush.bf16.msra.mxu0 %v1026
        %1042 = vmatmul.bf16.gmra.mxu0 %v1032
        %v1043 = vpop.f32.mrf.mxu0
        %v1044 = vadd.f32 0.0, %v1043
        %v1045 = vpop.f32.mrf.mxu0
        %v1046 = vadd.f32 0.0, %v1045
        %1047 = vdwg.mxu0
        %vm1048 = vcmask 130048
        %v1049 = vsel %vm1048, %v1044, -inf
        %1050 = vmax.xlane.f32.xlu0 %v1049
        %v1051 = vpop.xlane.xlu0 %1050
        %v1052 = vsel %vm1048, %v1046, -inf
        %1053 = vmax.xlane.f32.xlu0 %v1052
        %v1054 = vpop.xlane.xlu0 %1053
        %v1055 = vsub.f32 %v1044, %v1051
        %v1056 = vsub.f32 %v1046, %v1054
        %v1057 = vmul.f32 %v1055, 1.442695
        %v1058 = vpow.pop %v1057
        %v1059 = vmul.f32 %v1056, 1.442695
        %v1060 = vpow.pop %v1059
        %v1061 = vsel %vm1048, %v1058, 0.0
        %1062 = vadd.xlane.f32.xlu0 %v1061
        %v1063 = vpop.xlane.xlu0 %1062
        %v1064 = vsel %vm1048, %v1060, 0.0
        %1065 = vadd.xlane.f32.xlu0 %v1064
        %v1066 = vpop.xlane.xlu0 %1065
        %v1067 = vrcp.pop %v1063
        %v1068 = vrcp.pop %v1066
        %v1069 = vmul.f32 %v1058, %v1067
        %v1070 = vmul.f32 %v1060, %v1068
        %v1071 = vpack.c.bf16 %v1070, %v1069
        %v1074 = vunpack.c.l.b16 %v1011
        %v1075 = vunpack.c.l.b16 %v1012
        %v1076 = vpack.c.b16 %v1075, %v1074
        %v1079 = vsel %vm1048, %v1071, 0
        %1081 = vmatpush.bf16.msra.mxu0 0
        %1082 = vmatpush.bf16.msra.mxu0 0
        %1083 = vmatpush.bf16.msra.mxu0 0
        %1084 = vmatpush.bf16.msra.mxu0 0
        %1085 = vmatpush.bf16.msra.mxu0 0
        %1086 = vmatpush.bf16.msra.mxu0 0
        %1087 = vmatpush.bf16.msra.mxu0 0
        %1088 = vmatpush.bf16.msra.mxu0 %v1076
        %1089 = vmatmul.bf16.gmra.mxu0 %v1079
        %v1090 = vpop.f32.mrf.mxu0
        %v1091 = vadd.f32 0.0, %v1090
        %v1092 = vpop.f32.mrf.mxu0
        %v1093 = vadd.f32 0.0, %v1092
        %1094 = vdwg.mxu0
        %1095 = vrot.lane.b32.xlu0 %v1017, 96
        %v1096 = vpop.permute.xlu0 %1095
        %v1101 = vunpack.c.l.b16 %v999
        %v1102 = vunpack.c.l.b16 %v1000
        %v1103 = vunpack.c.l.b16 %v1001
        %v1104 = vunpack.c.l.b16 %v1002
        %v1105 = vpack.c.b16 %v1102, %v1101
        %v1106 = vpack.c.b16 %v1104, %v1103
        %v1110 = vsel %vm1030, %v1096, 0
        %1112 = vmatpush.bf16.msra.mxu0 0
        %1113 = vmatpush.bf16.msra.mxu0 0
        %1114 = vmatpush.bf16.msra.mxu0 0
        %1115 = vmatpush.bf16.msra.mxu0 0
        %1116 = vmatpush.bf16.msra.mxu0 0
        %1117 = vmatpush.bf16.msra.mxu0 0
        %1118 = vmatpush.bf16.msra.mxu0 %v1106
        %1119 = vmatpush.bf16.msra.mxu0 %v1105
        %1120 = vmatmul.bf16.gmra.mxu0 %v1110
        %v1121 = vpop.f32.mrf.mxu0
        %v1122 = vadd.f32 0.0, %v1121
        %v1123 = vpop.f32.mrf.mxu0
        %v1124 = vadd.f32 0.0, %v1123
        %1125 = vdwg.mxu0
        %v1126 = vsel %vm1048, %v1122, -inf
        %1127 = vmax.xlane.f32.xlu0 %v1126
        %v1128 = vpop.xlane.xlu0 %1127
        %v1129 = vsel %vm1048, %v1124, -inf
        %1130 = vmax.xlane.f32.xlu0 %v1129
        %v1131 = vpop.xlane.xlu0 %1130
        %v1132 = vsub.f32 %v1122, %v1128
        %v1133 = vsub.f32 %v1124, %v1131
        %v1134 = vmul.f32 %v1132, 1.442695
        %v1135 = vpow.pop %v1134
        %v1136 = vmul.f32 %v1133, 1.442695
        %v1137 = vpow.pop %v1136
        %v1138 = vsel %vm1048, %v1135, 0.0
        %1139 = vadd.xlane.f32.xlu0 %v1138
        %v1140 = vpop.xlane.xlu0 %1139
        %v1141 = vsel %vm1048, %v1137, 0.0
        %1142 = vadd.xlane.f32.xlu0 %v1141
        %v1143 = vpop.xlane.xlu0 %1142
        %v1144 = vrcp.pop %v1140
        %v1145 = vrcp.pop %v1143
        %v1146 = vmul.f32 %v1135, %v1144
        %v1147 = vmul.f32 %v1137, %v1145
        %v1148 = vpack.c.bf16 %v1147, %v1146
        %1149 = vrot.lane.b32.xlu0 %v1076, 96
        %v1150 = vpop.permute.xlu0 %1149
        %v1153 = vsel %vm1048, %v1148, 0
        %1155 = vmatpush.bf16.msra.mxu0 0
        %1156 = vmatpush.bf16.msra.mxu0 0
        %1157 = vmatpush.bf16.msra.mxu0 0
        %1158 = vmatpush.bf16.msra.mxu0 0
        %1159 = vmatpush.bf16.msra.mxu0 0
        %1160 = vmatpush.bf16.msra.mxu0 0
        %1161 = vmatpush.bf16.msra.mxu0 0
        %1162 = vmatpush.bf16.msra.mxu0 %v1150
        %1163 = vmatmul.bf16.gmra.mxu0 %v1153
        %v1164 = vpop.f32.mrf.mxu0
        %v1165 = vadd.f32 0.0, %v1164
        %v1166 = vpop.f32.mrf.mxu0
        %v1167 = vadd.f32 0.0, %v1166
        %1168 = vdwg.mxu0
        %1169 = vrot.lane.b32.xlu0 %v1017, 64
        %v1170 = vpop.permute.xlu0 %1169
        %v1175 = vunpack.c.l.b16 %v1003
        %v1176 = vunpack.c.l.b16 %v1004
        %v1177 = vunpack.c.l.b16 %v1005
        %v1178 = vunpack.c.l.b16 %v1006
        %v1179 = vpack.c.b16 %v1176, %v1175
        %v1180 = vpack.c.b16 %v1178, %v1177
        %v1184 = vsel %vm1030, %v1170, 0
        %1186 = vmatpush.bf16.msra.mxu0 0
        %1187 = vmatpush.bf16.msra.mxu0 0
        %1188 = vmatpush.bf16.msra.mxu0 0
        %1189 = vmatpush.bf16.msra.mxu0 0
        %1190 = vmatpush.bf16.msra.mxu0 0
        %1191 = vmatpush.bf16.msra.mxu0 0
        %1192 = vmatpush.bf16.msra.mxu0 %v1180
        %1193 = vmatpush.bf16.msra.mxu0 %v1179
        %1194 = vmatmul.bf16.gmra.mxu0 %v1184
        %v1195 = vpop.f32.mrf.mxu0
        %v1196 = vadd.f32 0.0, %v1195
        %v1197 = vpop.f32.mrf.mxu0
        %v1198 = vadd.f32 0.0, %v1197
        %1199 = vdwg.mxu0
        %v1200 = vsel %vm1048, %v1196, -inf
        %1201 = vmax.xlane.f32.xlu0 %v1200
        %v1202 = vpop.xlane.xlu0 %1201
        %v1203 = vsel %vm1048, %v1198, -inf
        %1204 = vmax.xlane.f32.xlu0 %v1203
        %v1205 = vpop.xlane.xlu0 %1204
        %v1206 = vsub.f32 %v1196, %v1202
        %v1207 = vsub.f32 %v1198, %v1205
        %v1208 = vmul.f32 %v1206, 1.442695
        %v1209 = vpow.pop %v1208
        %v1210 = vmul.f32 %v1207, 1.442695
        %v1211 = vpow.pop %v1210
        %v1212 = vsel %vm1048, %v1209, 0.0
        %1213 = vadd.xlane.f32.xlu0 %v1212
        %v1214 = vpop.xlane.xlu0 %1213
        %v1215 = vsel %vm1048, %v1211, 0.0
        %1216 = vadd.xlane.f32.xlu0 %v1215
        %v1217 = vpop.xlane.xlu0 %1216
        %v1218 = vrcp.pop %v1214
        %v1219 = vrcp.pop %v1217
        %v1220 = vmul.f32 %v1209, %v1218
        %v1221 = vmul.f32 %v1211, %v1219
        %v1222 = vpack.c.bf16 %v1221, %v1220
        %1223 = vrot.lane.b32.xlu0 %v1076, 64
        %v1224 = vpop.permute.xlu0 %1223
        %v1227 = vsel %vm1048, %v1222, 0
        %1229 = vmatpush.bf16.msra.mxu0 0
        %1230 = vmatpush.bf16.msra.mxu0 0
        %1231 = vmatpush.bf16.msra.mxu0 0
        %1232 = vmatpush.bf16.msra.mxu0 0
        %1233 = vmatpush.bf16.msra.mxu0 0
        %1234 = vmatpush.bf16.msra.mxu0 0
        %1235 = vmatpush.bf16.msra.mxu0 0
        %1236 = vmatpush.bf16.msra.mxu0 %v1224
        %1237 = vmatmul.bf16.gmra.mxu0 %v1227
        %v1238 = vpop.f32.mrf.mxu0
        %v1239 = vadd.f32 0.0, %v1238
        %v1240 = vpop.f32.mrf.mxu0
        %v1241 = vadd.f32 0.0, %v1240
        %1242 = vdwg.mxu0
        %1243 = vrot.lane.b32.xlu0 %v1017, 32
        %v1244 = vpop.permute.xlu0 %1243
        %v1249 = vunpack.c.l.b16 %v1007
        %v1250 = vunpack.c.l.b16 %v1008
        %v1251 = vunpack.c.l.b16 %v1009
        %v1252 = vunpack.c.l.b16 %v1010
        %v1253 = vpack.c.b16 %v1250, %v1249
        %v1254 = vpack.c.b16 %v1252, %v1251
        %v1258 = vsel %vm1030, %v1244, 0
        %1260 = vmatpush.bf16.msra.mxu0 0
        %1261 = vmatpush.bf16.msra.mxu0 0
        %1262 = vmatpush.bf16.msra.mxu0 0
        %1263 = vmatpush.bf16.msra.mxu0 0
        %1264 = vmatpush.bf16.msra.mxu0 0
        %1265 = vmatpush.bf16.msra.mxu0 0
        %1266 = vmatpush.bf16.msra.mxu0 %v1254
        %1267 = vmatpush.bf16.msra.mxu0 %v1253
        %1268 = vmatmul.bf16.gmra.mxu0 %v1258
        %v1269 = vpop.f32.mrf.mxu0
        %v1270 = vadd.f32 0.0, %v1269
        %v1271 = vpop.f32.mrf.mxu0
        %v1272 = vadd.f32 0.0, %v1271
        %1273 = vdwg.mxu0
        %v1274 = vsel %vm1048, %v1270, -inf
        %1275 = vmax.xlane.f32.xlu0 %v1274
        %v1276 = vpop.xlane.xlu0 %1275
        %v1277 = vsel %vm1048, %v1272, -inf
        %1278 = vmax.xlane.f32.xlu0 %v1277
        %v1279 = vpop.xlane.xlu0 %1278
        %v1280 = vsub.f32 %v1270, %v1276
        %v1281 = vsub.f32 %v1272, %v1279
        %v1282 = vmul.f32 %v1280, 1.442695
        %v1283 = vpow.pop %v1282
        %v1284 = vmul.f32 %v1281, 1.442695
        %v1285 = vpow.pop %v1284
        %v1286 = vsel %vm1048, %v1283, 0.0
        %1287 = vadd.xlane.f32.xlu0 %v1286
        %v1288 = vpop.xlane.xlu0 %1287
        %v1289 = vsel %vm1048, %v1285, 0.0
        %1290 = vadd.xlane.f32.xlu0 %v1289
        %v1291 = vpop.xlane.xlu0 %1290
        %v1292 = vrcp.pop %v1288
        %v1293 = vrcp.pop %v1291
        %v1294 = vmul.f32 %v1283, %v1292
        %v1295 = vmul.f32 %v1285, %v1293
        %v1296 = vpack.c.bf16 %v1295, %v1294
        %1297 = vrot.lane.b32.xlu0 %v1076, 32
        %v1298 = vpop.permute.xlu0 %1297
        %v1301 = vsel %vm1048, %v1296, 0
        %1303 = vmatpush.bf16.msra.mxu0 0
        %1304 = vmatpush.bf16.msra.mxu0 0
        %1305 = vmatpush.bf16.msra.mxu0 0
        %1306 = vmatpush.bf16.msra.mxu0 0
        %1307 = vmatpush.bf16.msra.mxu0 0
        %1308 = vmatpush.bf16.msra.mxu0 0
        %1309 = vmatpush.bf16.msra.mxu0 0
        %1310 = vmatpush.bf16.msra.mxu0 %v1298
        %1311 = vmatmul.bf16.gmra.mxu0 %v1301
        %v1312 = vpop.f32.mrf.mxu0
        %v1313 = vadd.f32 0.0, %v1312
        %v1314 = vpop.f32.mrf.mxu0
        %v1315 = vadd.f32 0.0, %v1314
        %1316 = vdwg.mxu0
        %1319 = vrot.lane.b32.xlu0 %v1165, 32
        %v1320 = vpop.permute.xlu0 %1319
        %1321 = vrot.lane.b32.xlu0 %v1167, 32
        %v1322 = vpop.permute.xlu0 %1321
        %1327 = vrot.lane.b32.xlu0 %v1239, 64
        %v1328 = vpop.permute.xlu0 %1327
        %1329 = vrot.lane.b32.xlu0 %v1241, 64
        %v1330 = vpop.permute.xlu0 %1329
        %1335 = vrot.lane.b32.xlu0 %v1313, 96
        %v1336 = vpop.permute.xlu0 %1335
        %1337 = vrot.lane.b32.xlu0 %v1315, 96
        %v1338 = vpop.permute.xlu0 %1337
        %v1341 = vsel %vm1030, %v1091, %v1320
        %v1342 = vsel %vm1030, %v1093, %v1322
        %vm1343 = vcmask 523264
        %v1344 = vsel %vm1343, %v1341, %v1328
        %v1345 = vsel %vm1343, %v1342, %v1330
        %vm1346 = vcmask 785408
        %v1347 = vsel %vm1346, %v1344, %v1336
        %v1348 = vsel %vm1346, %v1345, %v1338
        %v1349 = vpack.c.bf16 %v1348, %v1347
        %v1351 = vperm.slane %v900, 0
        %1353 = vmatpush.bf16.msra.mxu0 %v801
        %1354 = vmatpush.bf16.msra.mxu0 %v800
        %1355 = vmatpush.bf16.msra.mxu0 %v799
        %1356 = vmatpush.bf16.msra.mxu0 %v798
        %1357 = vmatpush.bf16.msra.mxu0 %v797
        %1358 = vmatpush.bf16.msra.mxu0 %v796
        %1359 = vmatpush.bf16.msra.mxu0 %v795
        %1360 = vmatpush.bf16.msra.mxu0 %v794
        %1361 = vmatmul.bf16.gmra.mxu0 %v1349
        %v1362 = vpop.f32.mrf.mxu0
        %v1363 = vadd.f32 %v1351, %v1362
        %v1364 = vpop.f32.mrf.mxu0
        %v1365 = vadd.f32 %v1351, %v1364
        %1366 = vdwg.mxu0
        %v1367 = vadd.f32 %v702, %v1363
        %v1368 = vadd.f32 %v703, %v1365
        %1369 = vadd.xlane.f32.xlu0 %v1367
        %v1370 = vpop.xlane.xlu0 %1369
        %1371 = vadd.xlane.f32.xlu0 %v1368
        %v1372 = vpop.xlane.xlu0 %1371
        %v1373 = vrcp.pop 128.0
        %v1374 = vmul.f32 128.0, %v1373
        %v1375 = vsub.f32 1.0, %v1374
        %v1376 = vmul.f32 %v1373, %v1375
        %v1377 = vadd.f32 %v1373, %v1376
        %vm1378 = vweird.f32 %v1373
        %v1379 = vsel %vm1378, %v1373, %v1377
        %v1380 = vmul.f32 %v1370, %v1379
        %v1381 = vmul.f32 %v1372, %v1379
        %v1382 = vsub.f32 %v1367, %v1380
        %v1383 = vsub.f32 %v1368, %v1381
        %v1384 = vmul.f32 %v1382, %v1382
        %v1385 = vmul.f32 %v1383, %v1383
        %1386 = vadd.xlane.f32.xlu0 %v1384
        %v1387 = vpop.xlane.xlu0 %1386
        %1388 = vadd.xlane.f32.xlu0 %v1385
        %v1389 = vpop.xlane.xlu0 %1388
        %v1390 = vmul.f32 %v1387, %v1379
        %v1391 = vmul.f32 %v1389, %v1379
        %v1392 = vadd.f32 %v1390, 1e-05
        %v1393 = vadd.f32 %v1391, 1e-05
        %v1394 = vrsqrt.pop %v1392
        %v1395 = vmul.f32 %v1394, %v1392
        %v1396 = vmul.f32 %v1395, %v1394
        %v1397 = vmul.f32 0.5, %v1396
        %v1398 = vsub.f32 1.5, %v1397
        %v1399 = vmul.f32 %v1394, %v1398
        %vm1400 = vweird.f32 %v1392
        %vm1401 = vweird.f32 %v1394
        %vm1402 = vmor %vm1400, %vm1401
        %v1403 = vsel %vm1402, %v1394, %v1399
        %v1404 = vrsqrt.pop %v1393
        %v1405 = vmul.f32 %v1404, %v1393
        %v1406 = vmul.f32 %v1405, %v1404
        %v1407 = vmul.f32 0.5, %v1406
        %v1408 = vsub.f32 1.5, %v1407
        %v1409 = vmul.f32 %v1404, %v1408
        %vm1410 = vweird.f32 %v1393
        %vm1411 = vweird.f32 %v1404
        %vm1412 = vmor %vm1410, %vm1411
        %v1413 = vsel %vm1412, %v1404, %v1409
        %v1414 = vmul.f32 %v1382, %v1403
        %v1415 = vmul.f32 %v1383, %v1413
        %v1417 = vperm.slane %v903, 0
        %v1419 = vmul.f32 %v1414, %v1417
        %v1420 = vmul.f32 %v1415, %v1417
        %v1422 = vperm.slane %v904, 0
        %v1424 = vadd.f32 %v1419, %v1422
        %v1425 = vadd.f32 %v1420, %v1422
        %v1426 = vpack.c.bf16 %v1425, %v1424
        %v1428 = vperm.slane %v901, 0
        %v1429 = vperm.slane %v901, 1
        %1432 = vmatpush.bf16.msra.mxu0 %v848
        %1433 = vmatpush.bf16.msra.mxu0 %v846
        %1434 = vmatpush.bf16.msra.mxu0 %v844
        %1435 = vmatpush.bf16.msra.mxu0 %v842
        %1436 = vmatpush.bf16.msra.mxu0 %v840
        %1437 = vmatpush.bf16.msra.mxu0 %v838
        %1438 = vmatpush.bf16.msra.mxu0 %v836
        %1439 = vmatpush.bf16.msra.mxu0 %v834
        %1440 = vmatmul.bf16.gmra.mxu0 %v1426
        %v1441 = vpop.f32.mrf.mxu0
        %v1442 = vadd.f32 %v1428, %v1441
        %v1443 = vpop.f32.mrf.mxu0
        %v1444 = vadd.f32 %v1428, %v1443
        %1445 = vdwg.mxu0
        %1446 = vmatpush.bf16.msra.mxu0 %v849
        %1447 = vmatpush.bf16.msra.mxu0 %v847
        %1448 = vmatpush.bf16.msra.mxu0 %v845
        %1449 = vmatpush.bf16.msra.mxu0 %v843
        %1450 = vmatpush.bf16.msra.mxu0 %v841
        %1451 = vmatpush.bf16.msra.mxu0 %v839
        %1452 = vmatpush.bf16.msra.mxu0 %v837
        %1453 = vmatpush.bf16.msra.mxu0 %v835
        %1454 = vmatmul.bf16.gmra.mxu0 %v1426
        %v1455 = vpop.f32.mrf.mxu0
        %v1456 = vadd.f32 %v1429, %v1455
        %v1457 = vpop.f32.mrf.mxu0
        %v1458 = vadd.f32 %v1429, %v1457
        %1459 = vdwg.mxu0
        %v1460 = vmax.f32 %v1442, 0.0
        %v1461 = vmax.f32 %v1456, 0.0
        %v1462 = vmax.f32 %v1444, 0.0
        %v1463 = vmax.f32 %v1458, 0.0
        %v1464 = vpack.c.bf16 %v1462, %v1460
        %v1465 = vpack.c.bf16 %v1463, %v1461
        %v1467 = vperm.slane %v902, 0
        %1469 = vmatpush.bf16.msra.mxu0 %v889
        %1470 = vmatpush.bf16.msra.mxu0 %v888
        %1471 = vmatpush.bf16.msra.mxu0 %v887
        %1472 = vmatpush.bf16.msra.mxu0 %v886
        %1473 = vmatpush.bf16.msra.mxu0 %v885
        %1474 = vmatpush.bf16.msra.mxu0 %v884
        %1475 = vmatpush.bf16.msra.mxu0 %v883
        %1476 = vmatpush.bf16.msra.mxu0 %v882
        %1477 = vmatmul.bf16.gmra.mxu0 %v1464
        %v1478 = vpop.f32.mrf.mxu0
        %v1479 = vadd.f32 %v1467, %v1478
        %v1480 = vpop.f32.mrf.mxu0
        %v1481 = vadd.f32 %v1467, %v1480
        %1482 = vdwg.mxu0
        %1483 = vmatpush.bf16.msra.mxu0 %v897
        %1484 = vmatpush.bf16.msra.mxu0 %v896
        %1485 = vmatpush.bf16.msra.mxu0 %v895
        %1486 = vmatpush.bf16.msra.mxu0 %v894
        %1487 = vmatpush.bf16.msra.mxu0 %v893
        %1488 = vmatpush.bf16.msra.mxu0 %v892
        %1489 = vmatpush.bf16.msra.mxu0 %v891
        %1490 = vmatpush.bf16.msra.mxu0 %v890
        %1491 = vmatmul.bf16.gmra.mxu0 %v1465
        %v1492 = vpop.f32.mrf.mxu0
        %v1493 = vadd.f32 %v1479, %v1492
        %v1494 = vpop.f32.mrf.mxu0
        %v1495 = vadd.f32 %v1481, %v1494
        %1496 = vdwg.mxu0
        %v1497 = vadd.f32 %v1424, %v1493
        %v1498 = vadd.f32 %v1425, %v1495
        %1499 = vadd.xlane.f32.xlu0 %v1497
        %v1500 = vpop.xlane.xlu0 %1499
        %1501 = vadd.xlane.f32.xlu0 %v1498
        %v1502 = vpop.xlane.xlu0 %1501
        %v1503 = vmul.f32 %v1500, %v1379
        %v1504 = vmul.f32 %v1502, %v1379
        %v1505 = vsub.f32 %v1497, %v1503
        %v1506 = vsub.f32 %v1498, %v1504
        %v1507 = vmul.f32 %v1505, %v1505
        %v1508 = vmul.f32 %v1506, %v1506
        %1509 = vadd.xlane.f32.xlu0 %v1507
        %v1510 = vpop.xlane.xlu0 %1509
        %1511 = vadd.xlane.f32.xlu0 %v1508
        %v1512 = vpop.xlane.xlu0 %1511
        %v1513 = vmul.f32 %v1510, %v1379
        %v1514 = vmul.f32 %v1512, %v1379
        %v1515 = vadd.f32 %v1513, 1e-05
        %v1516 = vadd.f32 %v1514, 1e-05
        %v1517 = vrsqrt.pop %v1515
        %v1518 = vmul.f32 %v1517, %v1515
        %v1519 = vmul.f32 %v1518, %v1517
        %v1520 = vmul.f32 0.5, %v1519
        %v1521 = vsub.f32 1.5, %v1520
        %v1522 = vmul.f32 %v1517, %v1521
        %vm1523 = vweird.f32 %v1515
        %vm1524 = vweird.f32 %v1517
        %vm1525 = vmor %vm1523, %vm1524
        %v1526 = vsel %vm1525, %v1517, %v1522
        %v1527 = vrsqrt.pop %v1516
        %v1528 = vmul.f32 %v1527, %v1516
        %v1529 = vmul.f32 %v1528, %v1527
        %v1530 = vmul.f32 0.5, %v1529
        %v1531 = vsub.f32 1.5, %v1530
        %v1532 = vmul.f32 %v1527, %v1531
        %vm1533 = vweird.f32 %v1516
        %vm1534 = vweird.f32 %v1527
        %vm1535 = vmor %vm1533, %vm1534
        %v1536 = vsel %vm1535, %v1527, %v1532
        %v1537 = vmul.f32 %v1505, %v1526
        %v1538 = vmul.f32 %v1506, %v1536
        %v1540 = vperm.slane %v905, 0
        %v1542 = vmul.f32 %v1537, %v1540
        %v1543 = vmul.f32 %v1538, %v1540
        %v1545 = vperm.slane %v906, 0
        %v1547 = vadd.f32 %v1542, %v1545
        %v1548 = vadd.f32 %v1543, %v1545
        %1549 = vst [vmem:[%s698] sm:$0xff] %v1547
        %1550 = vst [vmem:[%s698 + $0x8] sm:$0xff] %v1548
        %s1551 = sand.u32 %s409, 1
        %s1552 = scalar_lea.sflag [#allocation4], %s1551
        %s1553 = sand.u32 %s409, 1
        %s1554 = smul.addr %s1553, 16
        %s1555 = scalar_lea.vmem [#allocation16], %s1554
        // Predicated region
        $region117: #{tpu_custom_call.1} parent=83 // pred_check
          %p1556 = pneg %p419
        $region118: #{tpu_custom_call.1} parent=83 // pred_check_branch
          %1558 = sbr.rel (%p1556) target = $region120
        $region119: #{tpu_custom_call.1} parent=83 // pred_region
          %s1559 = smul.u32 2, %s44
          %1561 = vsyncadd %s1552, 0
          %s1562 = smul.addr %s43, 2
          %s1563 = sadd.s32 %s1559, %s1562
          %s1564 = smul.addr %s1563, 8
          %s1565 = scalar_lea.hbm %s16, %s1564
          %s1566 = sshll.u32 %s1555, 4
          %s1567 = int_to_ptr.vmem [resolvable:$true] %s1566
          %s1568 = sshll.u32 %s1565, 4
          %s1569 = int_to_ptr.hbm [resolvable:$true] %s1568
          %1574 = dma.vmem_to_hbm [thread:$0]  %s1567, 256, %s1569, %s1552, 128, 128, 8
        $region120: #{tpu_custom_call.1} parent=83 // pred_fallthru
          _
      $region84: #{tpu_custom_call.1} parent=5 // pred_fallthru
        _
      %p1575 = scmp.le.s32.totalorder 2, %s34
      // Predicated region
      $region121: #{tpu_custom_call.1} parent=5 // pred_check
        %p1576 = pneg %p1575
      $region122: #{tpu_custom_call.1} parent=5 // pred_check_branch
        %1578 = sbr.rel (%p1576) target = $region124
      $region123: #{tpu_custom_call.1} parent=5 // pred_region
        %s1579 = ssub.s32 %s34, 2
        // Predicated region
        $region125: #{tpu_custom_call.1} parent=123 // pred_check
          %p1580 = pneg %p425
        $region126: #{tpu_custom_call.1} parent=123 // pred_check_branch
          %1582 = sbr.rel (%p1580) target = $region128
        $region127: #{tpu_custom_call.1} parent=123 // pred_region
          %s1583 = sand.u32 %s410, 1
          %s1584 = scalar_lea.sflag [#allocation4], %s1583
          %s1585 = sand.u32 %s410, 1
          %s1586 = smul.addr %s1585, 16
          %s1587 = scalar_lea.vmem [#allocation16], %s1586
          %1589 = dma.done %s1584, 256
        $region128: #{tpu_custom_call.1} parent=123 // pred_fallthru
          _
      $region124: #{tpu_custom_call.1} parent=5 // pred_fallthru
        _
    $region6: #{tpu_custom_call.1} parent=1 // loop_footer
      %s38 = sadd.s32 1, %s34
    $region7: #{tpu_custom_call.1} parent=1 // loop_footer_branch
      %33 = sbr.rel target = $region3
    $region8: #{tpu_custom_call.1} parent=1 // loop_exit
      _
    %1590 = vsyncpa [#allocation3], 1
    %s1591 = scalar_lea.sflag [#allocation3], 1
    %1592 = vsyncpa %s1591, 1
    %1593 = vsyncpa [#allocation6], 1
    %s1594 = scalar_lea.sflag [#allocation6], 1
    %1595 = vsyncpa %s1594, 1
    %1596 = vsyncpa [#allocation9], 1
    %1597 = vsyncpa [#allocation12], 1
    %1598 = vsyncpa [#allocation15], 1
    %1599 = vsyncpa [#allocation4], 1
    %s1600 = scalar_lea.sflag [#allocation4], 1
    %1601 = vsyncpa %s1600, 1

</llo_original>
